<compile_context>
chip_gen: v6e
topology: v6e:2x2x1
jax: 0.10.0
libtpu: 0.0.40
codegen_flags: <defaults>
</compile_context>

<pallas_src>
import functools
import numpy as np
import jax
import jax.numpy as jnp
from jax.experimental import pallas as pl
from jax.experimental.pallas import tpu as pltpu

VOCAB = 2000
EMBED_DIM = 128
GRU_OUT = 32


def bigru_classifier_kernel(T, B,
                            x_ref,                        # (T*B, 2E) f32
                            wir_ref, wiz_ref, win_ref,    # (2E, 2H) block-diag per gate
                            bir_ref, biz_ref, bin_ref,    # (1, 2H) folded biases
                            whr_ref, whz_ref, whn_ref,    # (2H, 2H) block-diag per gate
                            bhn_ref,                      # (1, 2H) n-gate hidden bias
                            wcls_ref, bcls_ref,           # (1, 2H), (1, 1)
                            out_ref):                     # (B, 1) f32
    H2 = whr_ref.shape[0]   # 2H

    # --- Hoisted input projections (off the recurrent critical path). -------
    # Column layout per gate: [fwd dir at time t | bwd dir at time T-1-t].
    x = x_ref[...]
    gi_r = jnp.dot(x, wir_ref[...], preferred_element_type=jnp.float32) + bir_ref[...]
    gi_z = jnp.dot(x, wiz_ref[...], preferred_element_type=jnp.float32) + biz_ref[...]
    gi_n = jnp.dot(x, win_ref[...], preferred_element_type=jnp.float32) + bin_ref[...]

    # Hoist recurrent weights / bias (single VMEM load, single broadcast).
    whr = whr_ref[...]
    whz = whz_ref[...]
    whn = whn_ref[...]
    bhn = jnp.broadcast_to(bhn_ref[...], (B, H2))

    # --- Fused bidirectional recurrence: carry h = [h_fwd | h_bwd]. ---------
    h = jnp.zeros((B, H2), jnp.float32)
    for t in range(T):                     # T is static -> fully unrolled
        lo = t * B
        gr = gi_r[lo:lo + B]               # (B, 2H) — static row slice
        gz = gi_z[lo:lo + B]
        gn = gi_n[lo:lo + B]
        gh_r = jnp.dot(h, whr, preferred_element_type=jnp.float32)
        gh_z = jnp.dot(h, whz, preferred_element_type=jnp.float32)
        gh_n = jnp.dot(h, whn, preferred_element_type=jnp.float32)
        r = jax.nn.sigmoid(gr + gh_r)
        z = jax.nn.sigmoid(gz + gh_z)
        n = jnp.tanh(gn + r * (gh_n + bhn))
        h = (1.0 - z) * n + z * h

    # --- Classifier: no concat, no (B,2H)x(2H,1) matmul. --------------------
    out_ref[...] = (jnp.sum(h * wcls_ref[...], axis=-1, keepdims=True)
                    + bcls_ref[...])


def prepare_inputs(x_emb_bte, params):
    """Plain-JAX glue: build fused activations / block-diagonal weights."""
    B, T, E = x_emb_bte.shape
    H = GRU_OUT

    x_tbe = jnp.transpose(x_emb_bte, (1, 0, 2))          # (T, B, E)
    x_rev = x_tbe[::-1]                                  # time-reversed copy
    x_cat = jnp.concatenate([x_tbe, x_rev], axis=-1)     # (T, B, 2E)
    x_flat = x_cat.reshape(T * B, 2 * E)                 # (T*B, 2E)

    def gate(w, g):                                      # columns of gate g
        return w[:, g * H:(g + 1) * H]

    def blockdiag(wf, wb):
        k = wf.shape[0]
        out = jnp.zeros((2 * k, 2 * H), jnp.float32)
        return out.at[:k, :H].set(wf).at[k:, H:].set(wb)

    w_in, b_in = [], []
    for g in range(3):                                   # gate order [r, z, n]
        w_in.append(blockdiag(gate(params["wih_f"], g), gate(params["wih_b"], g)))
        b = jnp.concatenate([gate(params["bih_f"], g), gate(params["bih_b"], g)], axis=1)
        if g < 2:   # fold b_hr / b_hz into the precomputed projections too
            b = b + jnp.concatenate([gate(params["bhh_f"], g),
                                     gate(params["bhh_b"], g)], axis=1)
        b_in.append(b)

    w_hh = [blockdiag(gate(params["whh_f"], g), gate(params["whh_b"], g))
            for g in range(3)]
    b_hn = jnp.concatenate([gate(params["bhh_f"], 2), gate(params["bhh_b"], 2)], axis=1)

    wcls_row = params["wcls"].T                          # (1, 2H)
    bcls = params["bcls"]                                # (1, 1)

    args = [x_flat,
            w_in[0], w_in[1], w_in[2],
            b_in[0], b_in[1], b_in[2],
            w_hh[0], w_hh[1], w_hh[2],
            b_hn, wcls_row, bcls]
    return T, B, args


def bigru_classifier(x_emb_bte, params):
    T, B, args = prepare_inputs(x_emb_bte, params)
    vmem = pl.BlockSpec(memory_space=pltpu.MemorySpace.VMEM)
    kernel = functools.partial(bigru_classifier_kernel, T, B)
    return pl.pallas_call(
        kernel,
        out_shape=jax.ShapeDtypeStruct((B, 1), jnp.float32),
        in_specs=[vmem] * len(args),
        out_specs=vmem,
    )(*args)


def init_params(key):
    ks = jax.random.split(key, 12)
    std = 1.0 / np.sqrt(GRU_OUT)

    def u(k, shape):
        return jax.random.uniform(k, shape, jnp.float32, minval=-std, maxval=std)

    emb = jax.random.normal(ks[0], (VOCAB, EMBED_DIM), jnp.float32)
    params = {
        # forward direction (weights stored transposed: x @ W, gate order [r,z,n])
        "wih_f": u(ks[1], (EMBED_DIM, 3 * GRU_OUT)),
        "whh_f": u(ks[2], (GRU_OUT, 3 * GRU_OUT)),
        "bih_f": u(ks[3], (1, 3 * GRU_OUT)),
        "bhh_f": u(ks[4], (1, 3 * GRU_OUT)),
        # reverse direction
        "wih_b": u(ks[5], (EMBED_DIM, 3 * GRU_OUT)),
        "whh_b": u(ks[6], (GRU_OUT, 3 * GRU_OUT)),
        "bih_b": u(ks[7], (1, 3 * GRU_OUT)),
        "bhh_b": u(ks[8], (1, 3 * GRU_OUT)),
        # classifier Linear(2H, 1)
        "wcls": jax.random.uniform(ks[9], (2 * GRU_OUT, 1), jnp.float32,
                                   minval=-1.0 / np.sqrt(2 * GRU_OUT),
                                   maxval=1.0 / np.sqrt(2 * GRU_OUT)),
        "bcls": jax.random.uniform(ks[10], (1, 1), jnp.float32,
                                   minval=-1.0 / np.sqrt(2 * GRU_OUT),
                                   maxval=1.0 / np.sqrt(2 * GRU_OUT)),
    }
    return emb, params, ks[11]


def reference(tokens, emb, params):
    # Pure-JAX mirror of the PyTorch forward (correctness check).
    x = emb[tokens]                       # (B, T, E)
    B, T, _ = x.shape
    H = GRU_OUT

    def cell(x_t, h, wih, whh, bih, bhh):
        gi = x_t @ wih + bih
        gh = h @ whh + bhh
        r = jax.nn.sigmoid(gi[:, :H] + gh[:, :H])
        z = jax.nn.sigmoid(gi[:, H:2 * H] + gh[:, H:2 * H])
        n = jnp.tanh(gi[:, 2 * H:] + r * gh[:, 2 * H:])
        return (1.0 - z) * n + z * h

    h_f = jnp.zeros((B, H), jnp.float32)
    for t in range(T):
        h_f = cell(x[:, t], h_f, params["wih_f"], params["whh_f"],
                   params["bih_f"], params["bhh_f"])
    h_b = jnp.zeros((B, H), jnp.float32)
    for t in range(T - 1, -1, -1):
        h_b = cell(x[:, t], h_b, params["wih_b"], params["whh_b"],
                   params["bih_b"], params["bhh_b"])
    h = jnp.concatenate([h_f, h_b], axis=-1)
    return h @ params["wcls"] + params["bcls"]


if __name__ == "__main__":
    B, T = 2, 8
    emb, params, key_tok = init_params(jax.random.PRNGKey(0))
    tokens = jax.random.randint(key_tok, (B, T), 0, VOCAB, dtype=jnp.int32)

    # Embedding gather as glue in plain JAX; hot path (GRU + classifier) in Pallas.
    x_emb = emb[tokens]                                  # (B, T, E)

    out = bigru_classifier(x_emb, params)
    out = jax.block_until_ready(out)

    ref = jax.block_until_ready(reference(tokens, emb, params))
    assert out.shape == (B, 1)
    np.testing.assert_allclose(np.asarray(out), np.asarray(ref), atol=1e-2, rtol=1e-2)

    print("KERNEL_OK")
</pallas_src>

<mosaic_0001>
module attributes {stable_mosaic.version = 11 : i64} {
  func.func @bigru_classifier_kernel(%arg0: memref<16x256xf32, #tpu.memory_space<vmem>>, %arg1: memref<256x64xf32, #tpu.memory_space<vmem>>, %arg2: memref<256x64xf32, #tpu.memory_space<vmem>>, %arg3: memref<256x64xf32, #tpu.memory_space<vmem>>, %arg4: memref<1x64xf32, #tpu.memory_space<vmem>>, %arg5: memref<1x64xf32, #tpu.memory_space<vmem>>, %arg6: memref<1x64xf32, #tpu.memory_space<vmem>>, %arg7: memref<64x64xf32, #tpu.memory_space<vmem>>, %arg8: memref<64x64xf32, #tpu.memory_space<vmem>>, %arg9: memref<64x64xf32, #tpu.memory_space<vmem>>, %arg10: memref<1x64xf32, #tpu.memory_space<vmem>>, %arg11: memref<1x64xf32, #tpu.memory_space<vmem>>, %arg12: memref<1x1xf32, #tpu.memory_space<vmem>>, %arg13: memref<2x1xf32, #tpu.memory_space<vmem>>) attributes {dimension_semantics = [], scalar_prefetch = 0 : i64, scratch_operands = 0 : i64, tpu.core_type = #tpu.core_type<tc>} {
    %c0 = arith.constant 0 : index
    %c0_0 = arith.constant 0 : index
    %0 = vector.load %arg0[%c0, %c0_0] : memref<16x256xf32, #tpu.memory_space<vmem>>, vector<16x256xf32>
    %c0_1 = arith.constant 0 : index
    %c0_2 = arith.constant 0 : index
    %1 = vector.load %arg1[%c0_1, %c0_2] : memref<256x64xf32, #tpu.memory_space<vmem>>, vector<256x64xf32>
    %cst = arith.constant dense<0.000000e+00> : vector<16x64xf32>
    %2 = tpu.matmul %0, %1, %cst {dimension_numbers = #tpu.dot_dimension_numbers<[1], [0], [0], [1], [0, 0, 1, 1], [], []>} : vector<16x256xf32>, vector<256x64xf32>, vector<16x64xf32> -> vector<16x64xf32>
    %c0_3 = arith.constant 0 : index
    %c0_4 = arith.constant 0 : index
    %3 = vector.load %arg4[%c0_3, %c0_4] : memref<1x64xf32, #tpu.memory_space<vmem>>, vector<1x64xf32>
    %4 = vector.broadcast %3 : vector<1x64xf32> to vector<16x64xf32>
    %5 = arith.addf %2, %4 : vector<16x64xf32>
    %c0_5 = arith.constant 0 : index
    %c0_6 = arith.constant 0 : index
    %6 = vector.load %arg2[%c0_5, %c0_6] : memref<256x64xf32, #tpu.memory_space<vmem>>, vector<256x64xf32>
    %cst_7 = arith.constant dense<0.000000e+00> : vector<16x64xf32>
    %7 = tpu.matmul %0, %6, %cst_7 {dimension_numbers = #tpu.dot_dimension_numbers<[1], [0], [0], [1], [0, 0, 1, 1], [], []>} : vector<16x256xf32>, vector<256x64xf32>, vector<16x64xf32> -> vector<16x64xf32>
    %c0_8 = arith.constant 0 : index
    %c0_9 = arith.constant 0 : index
    %8 = vector.load %arg5[%c0_8, %c0_9] : memref<1x64xf32, #tpu.memory_space<vmem>>, vector<1x64xf32>
    %9 = vector.broadcast %8 : vector<1x64xf32> to vector<16x64xf32>
    %10 = arith.addf %7, %9 : vector<16x64xf32>
    %c0_10 = arith.constant 0 : index
    %c0_11 = arith.constant 0 : index
    %11 = vector.load %arg3[%c0_10, %c0_11] : memref<256x64xf32, #tpu.memory_space<vmem>>, vector<256x64xf32>
    %cst_12 = arith.constant dense<0.000000e+00> : vector<16x64xf32>
    %12 = tpu.matmul %0, %11, %cst_12 {dimension_numbers = #tpu.dot_dimension_numbers<[1], [0], [0], [1], [0, 0, 1, 1], [], []>} : vector<16x256xf32>, vector<256x64xf32>, vector<16x64xf32> -> vector<16x64xf32>
    %c0_13 = arith.constant 0 : index
    %c0_14 = arith.constant 0 : index
    %13 = vector.load %arg6[%c0_13, %c0_14] : memref<1x64xf32, #tpu.memory_space<vmem>>, vector<1x64xf32>
    %14 = vector.broadcast %13 : vector<1x64xf32> to vector<16x64xf32>
    %15 = arith.addf %12, %14 : vector<16x64xf32>
    %c0_15 = arith.constant 0 : index
    %c0_16 = arith.constant 0 : index
    %16 = vector.load %arg7[%c0_15, %c0_16] : memref<64x64xf32, #tpu.memory_space<vmem>>, vector<64x64xf32>
    %c0_17 = arith.constant 0 : index
    %c0_18 = arith.constant 0 : index
    %17 = vector.load %arg8[%c0_17, %c0_18] : memref<64x64xf32, #tpu.memory_space<vmem>>, vector<64x64xf32>
    %c0_19 = arith.constant 0 : index
    %c0_20 = arith.constant 0 : index
    %18 = vector.load %arg9[%c0_19, %c0_20] : memref<64x64xf32, #tpu.memory_space<vmem>>, vector<64x64xf32>
    %c0_21 = arith.constant 0 : index
    %c0_22 = arith.constant 0 : index
    %19 = vector.load %arg10[%c0_21, %c0_22] : memref<1x64xf32, #tpu.memory_space<vmem>>, vector<1x64xf32>
    %20 = vector.shape_cast %19 : vector<1x64xf32> to vector<1x64xf32>
    %21 = vector.broadcast %20 : vector<1x64xf32> to vector<2x64xf32>
    %cst_23 = arith.constant 0.000000e+00 : f32
    %22 = vector.broadcast %cst_23 : f32 to vector<2x64xf32>
    %23 = vector.extract_strided_slice %5 {offsets = [0, 0], sizes = [2, 64], strides = [1, 1]} : vector<16x64xf32> to vector<2x64xf32>
    %24 = vector.extract_strided_slice %10 {offsets = [0, 0], sizes = [2, 64], strides = [1, 1]} : vector<16x64xf32> to vector<2x64xf32>
    %25 = vector.extract_strided_slice %15 {offsets = [0, 0], sizes = [2, 64], strides = [1, 1]} : vector<16x64xf32> to vector<2x64xf32>
    %cst_24 = arith.constant dense<0.000000e+00> : vector<2x64xf32>
    %26 = tpu.matmul %22, %16, %cst_24 {dimension_numbers = #tpu.dot_dimension_numbers<[1], [0], [0], [1], [0, 0, 1, 1], [], []>} : vector<2x64xf32>, vector<64x64xf32>, vector<2x64xf32> -> vector<2x64xf32>
    %cst_25 = arith.constant dense<0.000000e+00> : vector<2x64xf32>
    %27 = tpu.matmul %22, %17, %cst_25 {dimension_numbers = #tpu.dot_dimension_numbers<[1], [0], [0], [1], [0, 0, 1, 1], [], []>} : vector<2x64xf32>, vector<64x64xf32>, vector<2x64xf32> -> vector<2x64xf32>
    %cst_26 = arith.constant dense<0.000000e+00> : vector<2x64xf32>
    %28 = tpu.matmul %22, %18, %cst_26 {dimension_numbers = #tpu.dot_dimension_numbers<[1], [0], [0], [1], [0, 0, 1, 1], [], []>} : vector<2x64xf32>, vector<64x64xf32>, vector<2x64xf32> -> vector<2x64xf32>
    %29 = arith.addf %23, %26 : vector<2x64xf32>
    %30 = arith.negf %29 : vector<2x64xf32>
    %31 = math.exp %30 : vector<2x64xf32>
    %cst_27 = arith.constant 1.000000e+00 : f32
    %32 = vector.broadcast %cst_27 : f32 to vector<2x64xf32>
    %33 = arith.addf %32, %31 : vector<2x64xf32>
    %34 = arith.divf %32, %33 : vector<2x64xf32>
    %35 = arith.addf %24, %27 : vector<2x64xf32>
    %36 = arith.negf %35 : vector<2x64xf32>
    %37 = math.exp %36 : vector<2x64xf32>
    %cst_28 = arith.constant 1.000000e+00 : f32
    %38 = vector.broadcast %cst_28 : f32 to vector<2x64xf32>
    %39 = arith.addf %38, %37 : vector<2x64xf32>
    %40 = arith.divf %38, %39 : vector<2x64xf32>
    %41 = arith.addf %28, %21 : vector<2x64xf32>
    %42 = arith.mulf %34, %41 : vector<2x64xf32>
    %43 = arith.addf %25, %42 : vector<2x64xf32>
    %44 = math.tanh %43 : vector<2x64xf32>
    %cst_29 = arith.constant 1.000000e+00 : f32
    %45 = vector.broadcast %cst_29 : f32 to vector<2x64xf32>
    %46 = arith.subf %45, %40 : vector<2x64xf32>
    %47 = arith.mulf %46, %44 : vector<2x64xf32>
    %48 = arith.mulf %40, %22 : vector<2x64xf32>
    %49 = arith.addf %47, %48 : vector<2x64xf32>
    %50 = vector.extract_strided_slice %5 {offsets = [2, 0], sizes = [2, 64], strides = [1, 1]} : vector<16x64xf32> to vector<2x64xf32>
    %51 = vector.extract_strided_slice %10 {offsets = [2, 0], sizes = [2, 64], strides = [1, 1]} : vector<16x64xf32> to vector<2x64xf32>
    %52 = vector.extract_strided_slice %15 {offsets = [2, 0], sizes = [2, 64], strides = [1, 1]} : vector<16x64xf32> to vector<2x64xf32>
    %cst_30 = arith.constant dense<0.000000e+00> : vector<2x64xf32>
    %53 = tpu.matmul %49, %16, %cst_30 {dimension_numbers = #tpu.dot_dimension_numbers<[1], [0], [0], [1], [0, 0, 1, 1], [], []>} : vector<2x64xf32>, vector<64x64xf32>, vector<2x64xf32> -> vector<2x64xf32>
    %cst_31 = arith.constant dense<0.000000e+00> : vector<2x64xf32>
    %54 = tpu.matmul %49, %17, %cst_31 {dimension_numbers = #tpu.dot_dimension_numbers<[1], [0], [0], [1], [0, 0, 1, 1], [], []>} : vector<2x64xf32>, vector<64x64xf32>, vector<2x64xf32> -> vector<2x64xf32>
    %cst_32 = arith.constant dense<0.000000e+00> : vector<2x64xf32>
    %55 = tpu.matmul %49, %18, %cst_32 {dimension_numbers = #tpu.dot_dimension_numbers<[1], [0], [0], [1], [0, 0, 1, 1], [], []>} : vector<2x64xf32>, vector<64x64xf32>, vector<2x64xf32> -> vector<2x64xf32>
    %56 = arith.addf %50, %53 : vector<2x64xf32>
    %57 = arith.negf %56 : vector<2x64xf32>
    %58 = math.exp %57 : vector<2x64xf32>
    %cst_33 = arith.constant 1.000000e+00 : f32
    %59 = vector.broadcast %cst_33 : f32 to vector<2x64xf32>
    %60 = arith.addf %59, %58 : vector<2x64xf32>
    %61 = arith.divf %59, %60 : vector<2x64xf32>
    %62 = arith.addf %51, %54 : vector<2x64xf32>
    %63 = arith.negf %62 : vector<2x64xf32>
    %64 = math.exp %63 : vector<2x64xf32>
    %cst_34 = arith.constant 1.000000e+00 : f32
    %65 = vector.broadcast %cst_34 : f32 to vector<2x64xf32>
    %66 = arith.addf %65, %64 : vector<2x64xf32>
    %67 = arith.divf %65, %66 : vector<2x64xf32>
    %68 = arith.addf %55, %21 : vector<2x64xf32>
    %69 = arith.mulf %61, %68 : vector<2x64xf32>
    %70 = arith.addf %52, %69 : vector<2x64xf32>
    %71 = math.tanh %70 : vector<2x64xf32>
    %cst_35 = arith.constant 1.000000e+00 : f32
    %72 = vector.broadcast %cst_35 : f32 to vector<2x64xf32>
    %73 = arith.subf %72, %67 : vector<2x64xf32>
    %74 = arith.mulf %73, %71 : vector<2x64xf32>
    %75 = arith.mulf %67, %49 : vector<2x64xf32>
    %76 = arith.addf %74, %75 : vector<2x64xf32>
    %77 = vector.extract_strided_slice %5 {offsets = [4, 0], sizes = [2, 64], strides = [1, 1]} : vector<16x64xf32> to vector<2x64xf32>
    %78 = vector.extract_strided_slice %10 {offsets = [4, 0], sizes = [2, 64], strides = [1, 1]} : vector<16x64xf32> to vector<2x64xf32>
    %79 = vector.extract_strided_slice %15 {offsets = [4, 0], sizes = [2, 64], strides = [1, 1]} : vector<16x64xf32> to vector<2x64xf32>
    %cst_36 = arith.constant dense<0.000000e+00> : vector<2x64xf32>
    %80 = tpu.matmul %76, %16, %cst_36 {dimension_numbers = #tpu.dot_dimension_numbers<[1], [0], [0], [1], [0, 0, 1, 1], [], []>} : vector<2x64xf32>, vector<64x64xf32>, vector<2x64xf32> -> vector<2x64xf32>
    %cst_37 = arith.constant dense<0.000000e+00> : vector<2x64xf32>
    %81 = tpu.matmul %76, %17, %cst_37 {dimension_numbers = #tpu.dot_dimension_numbers<[1], [0], [0], [1], [0, 0, 1, 1], [], []>} : vector<2x64xf32>, vector<64x64xf32>, vector<2x64xf32> -> vector<2x64xf32>
    %cst_38 = arith.constant dense<0.000000e+00> : vector<2x64xf32>
    %82 = tpu.matmul %76, %18, %cst_38 {dimension_numbers = #tpu.dot_dimension_numbers<[1], [0], [0], [1], [0, 0, 1, 1], [], []>} : vector<2x64xf32>, vector<64x64xf32>, vector<2x64xf32> -> vector<2x64xf32>
    %83 = arith.addf %77, %80 : vector<2x64xf32>
    %84 = arith.negf %83 : vector<2x64xf32>
    %85 = math.exp %84 : vector<2x64xf32>
    %cst_39 = arith.constant 1.000000e+00 : f32
    %86 = vector.broadcast %cst_39 : f32 to vector<2x64xf32>
    %87 = arith.addf %86, %85 : vector<2x64xf32>
    %88 = arith.divf %86, %87 : vector<2x64xf32>
    %89 = arith.addf %78, %81 : vector<2x64xf32>
    %90 = arith.negf %89 : vector<2x64xf32>
    %91 = math.exp %90 : vector<2x64xf32>
    %cst_40 = arith.constant 1.000000e+00 : f32
    %92 = vector.broadcast %cst_40 : f32 to vector<2x64xf32>
    %93 = arith.addf %92, %91 : vector<2x64xf32>
    %94 = arith.divf %92, %93 : vector<2x64xf32>
    %95 = arith.addf %82, %21 : vector<2x64xf32>
    %96 = arith.mulf %88, %95 : vector<2x64xf32>
    %97 = arith.addf %79, %96 : vector<2x64xf32>
    %98 = math.tanh %97 : vector<2x64xf32>
    %cst_41 = arith.constant 1.000000e+00 : f32
    %99 = vector.broadcast %cst_41 : f32 to vector<2x64xf32>
    %100 = arith.subf %99, %94 : vector<2x64xf32>
    %101 = arith.mulf %100, %98 : vector<2x64xf32>
    %102 = arith.mulf %94, %76 : vector<2x64xf32>
    %103 = arith.addf %101, %102 : vector<2x64xf32>
    %104 = vector.extract_strided_slice %5 {offsets = [6, 0], sizes = [2, 64], strides = [1, 1]} : vector<16x64xf32> to vector<2x64xf32>
    %105 = vector.extract_strided_slice %10 {offsets = [6, 0], sizes = [2, 64], strides = [1, 1]} : vector<16x64xf32> to vector<2x64xf32>
    %106 = vector.extract_strided_slice %15 {offsets = [6, 0], sizes = [2, 64], strides = [1, 1]} : vector<16x64xf32> to vector<2x64xf32>
    %cst_42 = arith.constant dense<0.000000e+00> : vector<2x64xf32>
    %107 = tpu.matmul %103, %16, %cst_42 {dimension_numbers = #tpu.dot_dimension_numbers<[1], [0], [0], [1], [0, 0, 1, 1], [], []>} : vector<2x64xf32>, vector<64x64xf32>, vector<2x64xf32> -> vector<2x64xf32>
    %cst_43 = arith.constant dense<0.000000e+00> : vector<2x64xf32>
    %108 = tpu.matmul %103, %17, %cst_43 {dimension_numbers = #tpu.dot_dimension_numbers<[1], [0], [0], [1], [0, 0, 1, 1], [], []>} : vector<2x64xf32>, vector<64x64xf32>, vector<2x64xf32> -> vector<2x64xf32>
    %cst_44 = arith.constant dense<0.000000e+00> : vector<2x64xf32>
    %109 = tpu.matmul %103, %18, %cst_44 {dimension_numbers = #tpu.dot_dimension_numbers<[1], [0], [0], [1], [0, 0, 1, 1], [], []>} : vector<2x64xf32>, vector<64x64xf32>, vector<2x64xf32> -> vector<2x64xf32>
    %110 = arith.addf %104, %107 : vector<2x64xf32>
    %111 = arith.negf %110 : vector<2x64xf32>
    %112 = math.exp %111 : vector<2x64xf32>
    %cst_45 = arith.constant 1.000000e+00 : f32
    %113 = vector.broadcast %cst_45 : f32 to vector<2x64xf32>
    %114 = arith.addf %113, %112 : vector<2x64xf32>
    %115 = arith.divf %113, %114 : vector<2x64xf32>
    %116 = arith.addf %105, %108 : vector<2x64xf32>
    %117 = arith.negf %116 : vector<2x64xf32>
    %118 = math.exp %117 : vector<2x64xf32>
    %cst_46 = arith.constant 1.000000e+00 : f32
    %119 = vector.broadcast %cst_46 : f32 to vector<2x64xf32>
    %120 = arith.addf %119, %118 : vector<2x64xf32>
    %121 = arith.divf %119, %120 : vector<2x64xf32>
    %122 = arith.addf %109, %21 : vector<2x64xf32>
    %123 = arith.mulf %115, %122 : vector<2x64xf32>
    %124 = arith.addf %106, %123 : vector<2x64xf32>
    %125 = math.tanh %124 : vector<2x64xf32>
    %cst_47 = arith.constant 1.000000e+00 : f32
    %126 = vector.broadcast %cst_47 : f32 to vector<2x64xf32>
    %127 = arith.subf %126, %121 : vector<2x64xf32>
    %128 = arith.mulf %127, %125 : vector<2x64xf32>
    %129 = arith.mulf %121, %103 : vector<2x64xf32>
    %130 = arith.addf %128, %129 : vector<2x64xf32>
    %131 = vector.extract_strided_slice %5 {offsets = [8, 0], sizes = [2, 64], strides = [1, 1]} : vector<16x64xf32> to vector<2x64xf32>
    %132 = vector.extract_strided_slice %10 {offsets = [8, 0], sizes = [2, 64], strides = [1, 1]} : vector<16x64xf32> to vector<2x64xf32>
    %133 = vector.extract_strided_slice %15 {offsets = [8, 0], sizes = [2, 64], strides = [1, 1]} : vector<16x64xf32> to vector<2x64xf32>
    %cst_48 = arith.constant dense<0.000000e+00> : vector<2x64xf32>
    %134 = tpu.matmul %130, %16, %cst_48 {dimension_numbers = #tpu.dot_dimension_numbers<[1], [0], [0], [1], [0, 0, 1, 1], [], []>} : vector<2x64xf32>, vector<64x64xf32>, vector<2x64xf32> -> vector<2x64xf32>
    %cst_49 = arith.constant dense<0.000000e+00> : vector<2x64xf32>
    %135 = tpu.matmul %130, %17, %cst_49 {dimension_numbers = #tpu.dot_dimension_numbers<[1], [0], [0], [1], [0, 0, 1, 1], [], []>} : vector<2x64xf32>, vector<64x64xf32>, vector<2x64xf32> -> vector<2x64xf32>
    %cst_50 = arith.constant dense<0.000000e+00> : vector<2x64xf32>
    %136 = tpu.matmul %130, %18, %cst_50 {dimension_numbers = #tpu.dot_dimension_numbers<[1], [0], [0], [1], [0, 0, 1, 1], [], []>} : vector<2x64xf32>, vector<64x64xf32>, vector<2x64xf32> -> vector<2x64xf32>
    %137 = arith.addf %131, %134 : vector<2x64xf32>
    %138 = arith.negf %137 : vector<2x64xf32>
    %139 = math.exp %138 : vector<2x64xf32>
    %cst_51 = arith.constant 1.000000e+00 : f32
    %140 = vector.broadcast %cst_51 : f32 to vector<2x64xf32>
    %141 = arith.addf %140, %139 : vector<2x64xf32>
    %142 = arith.divf %140, %141 : vector<2x64xf32>
    %143 = arith.addf %132, %135 : vector<2x64xf32>
    %144 = arith.negf %143 : vector<2x64xf32>
    %145 = math.exp %144 : vector<2x64xf32>
    %cst_52 = arith.constant 1.000000e+00 : f32
    %146 = vector.broadcast %cst_52 : f32 to vector<2x64xf32>
    %147 = arith.addf %146, %145 : vector<2x64xf32>
    %148 = arith.divf %146, %147 : vector<2x64xf32>
    %149 = arith.addf %136, %21 : vector<2x64xf32>
    %150 = arith.mulf %142, %149 : vector<2x64xf32>
    %151 = arith.addf %133, %150 : vector<2x64xf32>
    %152 = math.tanh %151 : vector<2x64xf32>
    %cst_53 = arith.constant 1.000000e+00 : f32
    %153 = vector.broadcast %cst_53 : f32 to vector<2x64xf32>
    %154 = arith.subf %153, %148 : vector<2x64xf32>
    %155 = arith.mulf %154, %152 : vector<2x64xf32>
    %156 = arith.mulf %148, %130 : vector<2x64xf32>
    %157 = arith.addf %155, %156 : vector<2x64xf32>
    %158 = vector.extract_strided_slice %5 {offsets = [10, 0], sizes = [2, 64], strides = [1, 1]} : vector<16x64xf32> to vector<2x64xf32>
    %159 = vector.extract_strided_slice %10 {offsets = [10, 0], sizes = [2, 64], strides = [1, 1]} : vector<16x64xf32> to vector<2x64xf32>
    %160 = vector.extract_strided_slice %15 {offsets = [10, 0], sizes = [2, 64], strides = [1, 1]} : vector<16x64xf32> to vector<2x64xf32>
    %cst_54 = arith.constant dense<0.000000e+00> : vector<2x64xf32>
    %161 = tpu.matmul %157, %16, %cst_54 {dimension_numbers = #tpu.dot_dimension_numbers<[1], [0], [0], [1], [0, 0, 1, 1], [], []>} : vector<2x64xf32>, vector<64x64xf32>, vector<2x64xf32> -> vector<2x64xf32>
    %cst_55 = arith.constant dense<0.000000e+00> : vector<2x64xf32>
    %162 = tpu.matmul %157, %17, %cst_55 {dimension_numbers = #tpu.dot_dimension_numbers<[1], [0], [0], [1], [0, 0, 1, 1], [], []>} : vector<2x64xf32>, vector<64x64xf32>, vector<2x64xf32> -> vector<2x64xf32>
    %cst_56 = arith.constant dense<0.000000e+00> : vector<2x64xf32>
    %163 = tpu.matmul %157, %18, %cst_56 {dimension_numbers = #tpu.dot_dimension_numbers<[1], [0], [0], [1], [0, 0, 1, 1], [], []>} : vector<2x64xf32>, vector<64x64xf32>, vector<2x64xf32> -> vector<2x64xf32>
    %164 = arith.addf %158, %161 : vector<2x64xf32>
    %165 = arith.negf %164 : vector<2x64xf32>
    %166 = math.exp %165 : vector<2x64xf32>
    %cst_57 = arith.constant 1.000000e+00 : f32
    %167 = vector.broadcast %cst_57 : f32 to vector<2x64xf32>
    %168 = arith.addf %167, %166 : vector<2x64xf32>
    %169 = arith.divf %167, %168 : vector<2x64xf32>
    %170 = arith.addf %159, %162 : vector<2x64xf32>
    %171 = arith.negf %170 : vector<2x64xf32>
    %172 = math.exp %171 : vector<2x64xf32>
    %cst_58 = arith.constant 1.000000e+00 : f32
    %173 = vector.broadcast %cst_58 : f32 to vector<2x64xf32>
    %174 = arith.addf %173, %172 : vector<2x64xf32>
    %175 = arith.divf %173, %174 : vector<2x64xf32>
    %176 = arith.addf %163, %21 : vector<2x64xf32>
    %177 = arith.mulf %169, %176 : vector<2x64xf32>
    %178 = arith.addf %160, %177 : vector<2x64xf32>
    %179 = math.tanh %178 : vector<2x64xf32>
    %cst_59 = arith.constant 1.000000e+00 : f32
    %180 = vector.broadcast %cst_59 : f32 to vector<2x64xf32>
    %181 = arith.subf %180, %175 : vector<2x64xf32>
    %182 = arith.mulf %181, %179 : vector<2x64xf32>
    %183 = arith.mulf %175, %157 : vector<2x64xf32>
    %184 = arith.addf %182, %183 : vector<2x64xf32>
    %185 = vector.extract_strided_slice %5 {offsets = [12, 0], sizes = [2, 64], strides = [1, 1]} : vector<16x64xf32> to vector<2x64xf32>
    %186 = vector.extract_strided_slice %10 {offsets = [12, 0], sizes = [2, 64], strides = [1, 1]} : vector<16x64xf32> to vector<2x64xf32>
    %187 = vector.extract_strided_slice %15 {offsets = [12, 0], sizes = [2, 64], strides = [1, 1]} : vector<16x64xf32> to vector<2x64xf32>
    %cst_60 = arith.constant dense<0.000000e+00> : vector<2x64xf32>
    %188 = tpu.matmul %184, %16, %cst_60 {dimension_numbers = #tpu.dot_dimension_numbers<[1], [0], [0], [1], [0, 0, 1, 1], [], []>} : vector<2x64xf32>, vector<64x64xf32>, vector<2x64xf32> -> vector<2x64xf32>
    %cst_61 = arith.constant dense<0.000000e+00> : vector<2x64xf32>
    %189 = tpu.matmul %184, %17, %cst_61 {dimension_numbers = #tpu.dot_dimension_numbers<[1], [0], [0], [1], [0, 0, 1, 1], [], []>} : vector<2x64xf32>, vector<64x64xf32>, vector<2x64xf32> -> vector<2x64xf32>
    %cst_62 = arith.constant dense<0.000000e+00> : vector<2x64xf32>
    %190 = tpu.matmul %184, %18, %cst_62 {dimension_numbers = #tpu.dot_dimension_numbers<[1], [0], [0], [1], [0, 0, 1, 1], [], []>} : vector<2x64xf32>, vector<64x64xf32>, vector<2x64xf32> -> vector<2x64xf32>
    %191 = arith.addf %185, %188 : vector<2x64xf32>
    %192 = arith.negf %191 : vector<2x64xf32>
    %193 = math.exp %192 : vector<2x64xf32>
    %cst_63 = arith.constant 1.000000e+00 : f32
    %194 = vector.broadcast %cst_63 : f32 to vector<2x64xf32>
    %195 = arith.addf %194, %193 : vector<2x64xf32>
    %196 = arith.divf %194, %195 : vector<2x64xf32>
    %197 = arith.addf %186, %189 : vector<2x64xf32>
    %198 = arith.negf %197 : vector<2x64xf32>
    %199 = math.exp %198 : vector<2x64xf32>
    %cst_64 = arith.constant 1.000000e+00 : f32
    %200 = vector.broadcast %cst_64 : f32 to vector<2x64xf32>
    %201 = arith.addf %200, %199 : vector<2x64xf32>
    %202 = arith.divf %200, %201 : vector<2x64xf32>
    %203 = arith.addf %190, %21 : vector<2x64xf32>
    %204 = arith.mulf %196, %203 : vector<2x64xf32>
    %205 = arith.addf %187, %204 : vector<2x64xf32>
    %206 = math.tanh %205 : vector<2x64xf32>
    %cst_65 = arith.constant 1.000000e+00 : f32
    %207 = vector.broadcast %cst_65 : f32 to vector<2x64xf32>
    %208 = arith.subf %207, %202 : vector<2x64xf32>
    %209 = arith.mulf %208, %206 : vector<2x64xf32>
    %210 = arith.mulf %202, %184 : vector<2x64xf32>
    %211 = arith.addf %209, %210 : vector<2x64xf32>
    %212 = vector.extract_strided_slice %5 {offsets = [14, 0], sizes = [2, 64], strides = [1, 1]} : vector<16x64xf32> to vector<2x64xf32>
    %213 = vector.extract_strided_slice %10 {offsets = [14, 0], sizes = [2, 64], strides = [1, 1]} : vector<16x64xf32> to vector<2x64xf32>
    %214 = vector.extract_strided_slice %15 {offsets = [14, 0], sizes = [2, 64], strides = [1, 1]} : vector<16x64xf32> to vector<2x64xf32>
    %cst_66 = arith.constant dense<0.000000e+00> : vector<2x64xf32>
    %215 = tpu.matmul %211, %16, %cst_66 {dimension_numbers = #tpu.dot_dimension_numbers<[1], [0], [0], [1], [0, 0, 1, 1], [], []>} : vector<2x64xf32>, vector<64x64xf32>, vector<2x64xf32> -> vector<2x64xf32>
    %cst_67 = arith.constant dense<0.000000e+00> : vector<2x64xf32>
    %216 = tpu.matmul %211, %17, %cst_67 {dimension_numbers = #tpu.dot_dimension_numbers<[1], [0], [0], [1], [0, 0, 1, 1], [], []>} : vector<2x64xf32>, vector<64x64xf32>, vector<2x64xf32> -> vector<2x64xf32>
    %cst_68 = arith.constant dense<0.000000e+00> : vector<2x64xf32>
    %217 = tpu.matmul %211, %18, %cst_68 {dimension_numbers = #tpu.dot_dimension_numbers<[1], [0], [0], [1], [0, 0, 1, 1], [], []>} : vector<2x64xf32>, vector<64x64xf32>, vector<2x64xf32> -> vector<2x64xf32>
    %218 = arith.addf %212, %215 : vector<2x64xf32>
    %219 = arith.negf %218 : vector<2x64xf32>
    %220 = math.exp %219 : vector<2x64xf32>
    %cst_69 = arith.constant 1.000000e+00 : f32
    %221 = vector.broadcast %cst_69 : f32 to vector<2x64xf32>
    %222 = arith.addf %221, %220 : vector<2x64xf32>
    %223 = arith.divf %221, %222 : vector<2x64xf32>
    %224 = arith.addf %213, %216 : vector<2x64xf32>
    %225 = arith.negf %224 : vector<2x64xf32>
    %226 = math.exp %225 : vector<2x64xf32>
    %cst_70 = arith.constant 1.000000e+00 : f32
    %227 = vector.broadcast %cst_70 : f32 to vector<2x64xf32>
    %228 = arith.addf %227, %226 : vector<2x64xf32>
    %229 = arith.divf %227, %228 : vector<2x64xf32>
    %230 = arith.addf %217, %21 : vector<2x64xf32>
    %231 = arith.mulf %223, %230 : vector<2x64xf32>
    %232 = arith.addf %214, %231 : vector<2x64xf32>
    %233 = math.tanh %232 : vector<2x64xf32>
    %cst_71 = arith.constant 1.000000e+00 : f32
    %234 = vector.broadcast %cst_71 : f32 to vector<2x64xf32>
    %235 = arith.subf %234, %229 : vector<2x64xf32>
    %236 = arith.mulf %235, %233 : vector<2x64xf32>
    %237 = arith.mulf %229, %211 : vector<2x64xf32>
    %238 = arith.addf %236, %237 : vector<2x64xf32>
    %c0_72 = arith.constant 0 : index
    %c0_73 = arith.constant 0 : index
    %239 = vector.load %arg11[%c0_72, %c0_73] : memref<1x64xf32, #tpu.memory_space<vmem>>, vector<1x64xf32>
    %240 = vector.broadcast %239 : vector<1x64xf32> to vector<2x64xf32>
    %241 = arith.mulf %238, %240 : vector<2x64xf32>
    %cst_74 = arith.constant dense<0.000000e+00> : vector<2xf32>
    %242 = vector.multi_reduction <add>, %241, %cst_74 [1] : vector<2x64xf32> to vector<2xf32>
    %243 = vector.shape_cast %242 : vector<2xf32> to vector<2x1xf32>
    %c0_75 = arith.constant 0 : index
    %c0_76 = arith.constant 0 : index
    %244 = vector.load %arg12[%c0_75, %c0_76] : memref<1x1xf32, #tpu.memory_space<vmem>>, vector<1x1xf32>
    %245 = vector.broadcast %244 : vector<1x1xf32> to vector<2x1xf32>
    %246 = arith.addf %243, %245 : vector<2x1xf32>
    %c0_77 = arith.constant 0 : index
    %c0_78 = arith.constant 0 : index
    %247 = vector.load %arg13[%c0_77, %c0_78] : memref<2x1xf32, #tpu.memory_space<vmem>>, vector<2x1xf32>
    tpu.vector_store %arg13[%c0_77, %c0_78], %246 {strides = array<i32>} : memref<2x1xf32, #tpu.memory_space<vmem>>, vector<2x1xf32>,
    return
  }
}

</mosaic_0001>

<llo_original>
// kernel: tpu_custom_call.1
$region0: #{tpu_custom_call.1}
  #allocation0 [shape = 'u32[]', space=smem, size = 0x4, offset = 0x4, fixed_abs, tag = 'smem constant byte address 0x4 - core index']
  #allocation1 [shape = 'u32[144,128]{1,0:T(1,128)}', space=vmem, size = 0x12000, scoped, tag = 'internal scratch']
  #allocation2 [shape = 'f32[1,1]{1,0:T(1,128)S(1)}', space=vmem, size = 0x200, scoped, tag = 'scoped memory for tpu_custom_call.1']
  %s0 = inlined_call_operand.vmem [shape: f32[16,256], index: 0, kind: input, shape index: {}]
  %s1 = inlined_call_operand.vmem [shape: f32[256,64], index: 1, kind: input, shape index: {}]
  %s2 = inlined_call_operand.vmem [shape: f32[256,64], index: 2, kind: input, shape index: {}]
  %s3 = inlined_call_operand.vmem [shape: f32[256,64], index: 3, kind: input, shape index: {}]
  %s4 = inlined_call_operand.vmem [shape: f32[1,64], index: 4, kind: input, shape index: {}]
  %s5 = inlined_call_operand.vmem [shape: f32[1,64], index: 5, kind: input, shape index: {}]
  %s6 = inlined_call_operand.vmem [shape: f32[1,64], index: 6, kind: input, shape index: {}]
  %s7 = inlined_call_operand.vmem [shape: f32[64,64], index: 7, kind: input, shape index: {}]
  %s8 = inlined_call_operand.vmem [shape: f32[64,64], index: 8, kind: input, shape index: {}]
  %s9 = inlined_call_operand.vmem [shape: f32[64,64], index: 9, kind: input, shape index: {}]
  %s10 = inlined_call_operand.vmem [shape: f32[1,64], index: 10, kind: input, shape index: {}]
  %s11 = inlined_call_operand.vmem [shape: f32[1,64], index: 11, kind: input, shape index: {}]
  %s12 = inlined_call_operand.<no memory space> [shape: f32[1,1], index: 12, kind: input, shape index: {}]
  %s13 = inlined_call_operand.vmem [shape: f32[2,1], index: 13, kind: output, shape index: {}]
  %s14 = sld [smem:[#allocation0]]
  $region62: #{tpu_custom_call.1} parent=0
    _
  %s16 = ssub.s32 1, %s14
  %s17 = scalar_select 0, %s16, %s14
  %v18 = vstv %s12
  %19 = vst [vmem:[#allocation2] sm:$0x1] %v18
  // Predicated region
  $region2: #{tpu_custom_call.1} parent=0 // pred_check
    _
  $region3: #{tpu_custom_call.1} parent=0 // pred_check_branch
    %21 = sbr.rel (0) target = $region5
  $region4: #{tpu_custom_call.1} parent=0 // pred_region
    _
  $region5: #{tpu_custom_call.1} parent=0 // pred_fallthru
    _
  // Predicated region
  $region6: #{tpu_custom_call.1} parent=0 // pred_check
    _
  $region7: #{tpu_custom_call.1} parent=0 // pred_check_branch
    %23 = sbr.rel (0) target = $region9
  $region8: #{tpu_custom_call.1} parent=0 // pred_region
    _
  $region9: #{tpu_custom_call.1} parent=0 // pred_fallthru
    _
  // Predicated region
  $region10: #{tpu_custom_call.1} parent=0 // pred_check
    _
  $region11: #{tpu_custom_call.1} parent=0 // pred_check_branch
    %25 = sbr.rel (0) target = $region13
  $region12: #{tpu_custom_call.1} parent=0 // pred_region
    _
  $region13: #{tpu_custom_call.1} parent=0 // pred_fallthru
    _
  // Predicated region
  $region14: #{tpu_custom_call.1} parent=0 // pred_check
    _
  $region15: #{tpu_custom_call.1} parent=0 // pred_check_branch
    %27 = sbr.rel (0) target = $region17
  $region16: #{tpu_custom_call.1} parent=0 // pred_region
    _
  $region17: #{tpu_custom_call.1} parent=0 // pred_fallthru
    _
  // Predicated region
  $region18: #{tpu_custom_call.1} parent=0 // pred_check
    _
  $region19: #{tpu_custom_call.1} parent=0 // pred_check_branch
    %29 = sbr.rel (0) target = $region21
  $region20: #{tpu_custom_call.1} parent=0 // pred_region
    _
  $region21: #{tpu_custom_call.1} parent=0 // pred_fallthru
    _
  // Predicated region
  $region22: #{tpu_custom_call.1} parent=0 // pred_check
    _
  $region23: #{tpu_custom_call.1} parent=0 // pred_check_branch
    %31 = sbr.rel (0) target = $region25
  $region24: #{tpu_custom_call.1} parent=0 // pred_region
    _
  $region25: #{tpu_custom_call.1} parent=0 // pred_fallthru
    _
  // Predicated region
  $region26: #{tpu_custom_call.1} parent=0 // pred_check
    _
  $region27: #{tpu_custom_call.1} parent=0 // pred_check_branch
    %33 = sbr.rel (0) target = $region29
  $region28: #{tpu_custom_call.1} parent=0 // pred_region
    _
  $region29: #{tpu_custom_call.1} parent=0 // pred_fallthru
    _
  // Predicated region
  $region30: #{tpu_custom_call.1} parent=0 // pred_check
    _
  $region31: #{tpu_custom_call.1} parent=0 // pred_check_branch
    %35 = sbr.rel (0) target = $region33
  $region32: #{tpu_custom_call.1} parent=0 // pred_region
    _
  $region33: #{tpu_custom_call.1} parent=0 // pred_fallthru
    _
  // Predicated region
  $region34: #{tpu_custom_call.1} parent=0 // pred_check
    _
  $region35: #{tpu_custom_call.1} parent=0 // pred_check_branch
    %37 = sbr.rel (0) target = $region37
  $region36: #{tpu_custom_call.1} parent=0 // pred_region
    _
  $region37: #{tpu_custom_call.1} parent=0 // pred_fallthru
    _
  // Predicated region
  $region38: #{tpu_custom_call.1} parent=0 // pred_check
    _
  $region39: #{tpu_custom_call.1} parent=0 // pred_check_branch
    %39 = sbr.rel (0) target = $region41
  $region40: #{tpu_custom_call.1} parent=0 // pred_region
    _
  $region41: #{tpu_custom_call.1} parent=0 // pred_fallthru
    _
  // Predicated region
  $region42: #{tpu_custom_call.1} parent=0 // pred_check
    _
  $region43: #{tpu_custom_call.1} parent=0 // pred_check_branch
    %41 = sbr.rel (0) target = $region45
  $region44: #{tpu_custom_call.1} parent=0 // pred_region
    _
  $region45: #{tpu_custom_call.1} parent=0 // pred_fallthru
    _
  // Predicated region
  $region46: #{tpu_custom_call.1} parent=0 // pred_check
    _
  $region47: #{tpu_custom_call.1} parent=0 // pred_check_branch
    %43 = sbr.rel (0) target = $region49
  $region48: #{tpu_custom_call.1} parent=0 // pred_region
    _
  $region49: #{tpu_custom_call.1} parent=0 // pred_fallthru
    _
  // Predicated region
  $region50: #{tpu_custom_call.1} parent=0 // pred_check
    _
  $region51: #{tpu_custom_call.1} parent=0 // pred_check_branch
    %45 = sbr.rel (0) target = $region53
  $region52: #{tpu_custom_call.1} parent=0 // pred_region
    _
  $region53: #{tpu_custom_call.1} parent=0 // pred_fallthru
    _
  %v46 = vld [vmem:[%s0] sm:$0xff]
  %v47 = vld [vmem:[%s0 + $0x8] sm:$0xff]
  %v48 = vld [vmem:[%s0 + $0x10] sm:$0xff]
  %v49 = vld [vmem:[%s0 + $0x18] sm:$0xff]
  %v50 = vld [vmem:[%s1] sm:$0xff]
  %v51 = vld [vmem:[%s1 + $0x8] sm:$0xff]
  %v52 = vld [vmem:[%s1 + $0x10] sm:$0xff]
  %v53 = vld [vmem:[%s1 + $0x18] sm:$0xff]
  %v54 = vld [vmem:[%s1 + $0x20] sm:$0xff]
  %v55 = vld [vmem:[%s1 + $0x28] sm:$0xff]
  %v56 = vld [vmem:[%s1 + $0x30] sm:$0xff]
  %v57 = vld [vmem:[%s1 + $0x38] sm:$0xff]
  %v58 = vld [vmem:[%s1 + $0x40] sm:$0xff]
  %v59 = vld [vmem:[%s1 + $0x48] sm:$0xff]
  %v60 = vld [vmem:[%s1 + $0x50] sm:$0xff]
  %v61 = vld [vmem:[%s1 + $0x58] sm:$0xff]
  %v62 = vld [vmem:[%s1 + $0x60] sm:$0xff]
  %v63 = vld [vmem:[%s1 + $0x68] sm:$0xff]
  %v64 = vld [vmem:[%s1 + $0x70] sm:$0xff]
  %v65 = vld [vmem:[%s1 + $0x78] sm:$0xff]
  %v66 = vld [vmem:[%s1 + $0x80] sm:$0xff]
  %v67 = vld [vmem:[%s1 + $0x88] sm:$0xff]
  %v68 = vld [vmem:[%s1 + $0x90] sm:$0xff]
  %v69 = vld [vmem:[%s1 + $0x98] sm:$0xff]
  %v70 = vld [vmem:[%s1 + $0xa0] sm:$0xff]
  %v71 = vld [vmem:[%s1 + $0xa8] sm:$0xff]
  %v72 = vld [vmem:[%s1 + $0xb0] sm:$0xff]
  %v73 = vld [vmem:[%s1 + $0xb8] sm:$0xff]
  %v74 = vld [vmem:[%s1 + $0xc0] sm:$0xff]
  %v75 = vld [vmem:[%s1 + $0xc8] sm:$0xff]
  %v76 = vld [vmem:[%s1 + $0xd0] sm:$0xff]
  %v77 = vld [vmem:[%s1 + $0xd8] sm:$0xff]
  %v78 = vld [vmem:[%s1 + $0xe0] sm:$0xff]
  %v79 = vld [vmem:[%s1 + $0xe8] sm:$0xff]
  %v80 = vld [vmem:[%s1 + $0xf0] sm:$0xff]
  %v81 = vld [vmem:[%s1 + $0xf8] sm:$0xff]
  %v82 = vld [vmem:[%s4] sm:$0x1]
  %v84 = vlaneseq
  %v85 = vshrl.u32 %v84, 7
  %v86 = vsub.s32 0, %v85
  %v87 = vrot.slane %v82, %v86
  %89 = vmatprep.subr.mxu0 0.0
  %90 = vmatpush1.msra.mxu0 %v65
  %91 = vmatprep.subr.mxu0 0.0
  %92 = vmatpush1.msra.mxu0 %v64
  %93 = vmatprep.subr.mxu0 0.0
  %94 = vmatpush1.msra.mxu0 %v63
  %95 = vmatprep.subr.mxu0 0.0
  %96 = vmatpush1.msra.mxu0 %v62
  %97 = vmatprep.subr.mxu0 0.0
  %98 = vmatpush1.msra.mxu0 %v61
  %99 = vmatprep.subr.mxu0 0.0
  %100 = vmatpush1.msra.mxu0 %v60
  %101 = vmatprep.subr.mxu0 0.0
  %102 = vmatpush1.msra.mxu0 %v59
  %103 = vmatprep.subr.mxu0 0.0
  %104 = vmatpush1.msra.mxu0 %v58
  %105 = vmatprep.subr.mxu0 0.0
  %106 = vmatpush1.msra.mxu0 %v57
  %107 = vmatprep.subr.mxu0 0.0
  %108 = vmatpush1.msra.mxu0 %v56
  %109 = vmatprep.subr.mxu0 0.0
  %110 = vmatpush1.msra.mxu0 %v55
  %111 = vmatprep.subr.mxu0 0.0
  %112 = vmatpush1.msra.mxu0 %v54
  %113 = vmatprep.subr.mxu0 0.0
  %114 = vmatpush1.msra.mxu0 %v53
  %115 = vmatprep.subr.mxu0 0.0
  %116 = vmatpush1.msra.mxu0 %v52
  %117 = vmatprep.subr.mxu0 0.0
  %118 = vmatpush1.msra.mxu0 %v51
  %119 = vmatprep.subr.mxu0 0.0
  %120 = vmatpush1.msra.mxu0 %v50
  %121 = vmatprep.subr.mxu0 0.0
  %122 = vmatpush2.msra.mxu0 %v81
  %123 = vmatprep.subr.mxu0 0.0
  %124 = vmatpush2.msra.mxu0 %v80
  %125 = vmatprep.subr.mxu0 0.0
  %126 = vmatpush2.msra.mxu0 %v79
  %127 = vmatprep.subr.mxu0 0.0
  %128 = vmatpush2.msra.mxu0 %v78
  %129 = vmatprep.subr.mxu0 0.0
  %130 = vmatpush2.msra.mxu0 %v77
  %131 = vmatprep.subr.mxu0 0.0
  %132 = vmatpush2.msra.mxu0 %v76
  %133 = vmatprep.subr.mxu0 0.0
  %134 = vmatpush2.msra.mxu0 %v75
  %135 = vmatprep.subr.mxu0 0.0
  %136 = vmatpush2.msra.mxu0 %v74
  %137 = vmatprep.subr.mxu0 0.0
  %138 = vmatpush2.msra.mxu0 %v73
  %139 = vmatprep.subr.mxu0 0.0
  %140 = vmatpush2.msra.mxu0 %v72
  %141 = vmatprep.subr.mxu0 0.0
  %142 = vmatpush2.msra.mxu0 %v71
  %143 = vmatprep.subr.mxu0 0.0
  %144 = vmatpush2.msra.mxu0 %v70
  %145 = vmatprep.subr.mxu0 0.0
  %146 = vmatpush2.msra.mxu0 %v69
  %147 = vmatprep.subr.mxu0 0.0
  %148 = vmatpush2.msra.mxu0 %v68
  %149 = vmatprep.subr.mxu0 0.0
  %150 = vmatpush2.msra.mxu0 %v67
  %151 = vmatprep.subr.mxu0 0.0
  %152 = vmatpush2.msra.mxu0 %v66
  %153 = vmatprep.mubr.f32.mxu0 %v47
  %154 = vmatmul.mubr.f32.gmra.mxu0 %v46
  %v155 = vpop.f32.mrf.mxu0
  %v156 = vadd.f32 %v87, %v155
  %v157 = vpop.f32.mrf.mxu0
  %158 = vmatprep.mubr.f32.mxu0 %v49
  %159 = vmatmul.mubr.f32.gmra.mxu0 %v48
  %v160 = vpop.f32.mrf.mxu0
  %v161 = vadd.f32 %v87, %v160
  %v162 = vpop.f32.mrf.mxu0
  %163 = vdwg.mxu0
  %v164 = vld [vmem:[%s2] sm:$0xff]
  %v165 = vld [vmem:[%s2 + $0x8] sm:$0xff]
  %v166 = vld [vmem:[%s2 + $0x10] sm:$0xff]
  %v167 = vld [vmem:[%s2 + $0x18] sm:$0xff]
  %v168 = vld [vmem:[%s2 + $0x20] sm:$0xff]
  %v169 = vld [vmem:[%s2 + $0x28] sm:$0xff]
  %v170 = vld [vmem:[%s2 + $0x30] sm:$0xff]
  %v171 = vld [vmem:[%s2 + $0x38] sm:$0xff]
  %v172 = vld [vmem:[%s2 + $0x40] sm:$0xff]
  %v173 = vld [vmem:[%s2 + $0x48] sm:$0xff]
  %v174 = vld [vmem:[%s2 + $0x50] sm:$0xff]
  %v175 = vld [vmem:[%s2 + $0x58] sm:$0xff]
  %v176 = vld [vmem:[%s2 + $0x60] sm:$0xff]
  %v177 = vld [vmem:[%s2 + $0x68] sm:$0xff]
  %v178 = vld [vmem:[%s2 + $0x70] sm:$0xff]
  %v179 = vld [vmem:[%s2 + $0x78] sm:$0xff]
  %v180 = vld [vmem:[%s2 + $0x80] sm:$0xff]
  %v181 = vld [vmem:[%s2 + $0x88] sm:$0xff]
  %v182 = vld [vmem:[%s2 + $0x90] sm:$0xff]
  %v183 = vld [vmem:[%s2 + $0x98] sm:$0xff]
  %v184 = vld [vmem:[%s2 + $0xa0] sm:$0xff]
  %v185 = vld [vmem:[%s2 + $0xa8] sm:$0xff]
  %v186 = vld [vmem:[%s2 + $0xb0] sm:$0xff]
  %v187 = vld [vmem:[%s2 + $0xb8] sm:$0xff]
  %v188 = vld [vmem:[%s2 + $0xc0] sm:$0xff]
  %v189 = vld [vmem:[%s2 + $0xc8] sm:$0xff]
  %v190 = vld [vmem:[%s2 + $0xd0] sm:$0xff]
  %v191 = vld [vmem:[%s2 + $0xd8] sm:$0xff]
  %v192 = vld [vmem:[%s2 + $0xe0] sm:$0xff]
  %v193 = vld [vmem:[%s2 + $0xe8] sm:$0xff]
  %v194 = vld [vmem:[%s2 + $0xf0] sm:$0xff]
  %v195 = vld [vmem:[%s2 + $0xf8] sm:$0xff]
  %v196 = vld [vmem:[%s5] sm:$0x1]
  %v198 = vlaneseq
  %v199 = vshrl.u32 %v198, 7
  %v200 = vsub.s32 0, %v199
  %v201 = vrot.slane %v196, %v200
  %203 = vmatprep.subr.mxu0 0.0
  %204 = vmatpush1.msra.mxu0 %v179
  %205 = vmatprep.subr.mxu0 0.0
  %206 = vmatpush1.msra.mxu0 %v178
  %207 = vmatprep.subr.mxu0 0.0
  %208 = vmatpush1.msra.mxu0 %v177
  %209 = vmatprep.subr.mxu0 0.0
  %210 = vmatpush1.msra.mxu0 %v176
  %211 = vmatprep.subr.mxu0 0.0
  %212 = vmatpush1.msra.mxu0 %v175
  %213 = vmatprep.subr.mxu0 0.0
  %214 = vmatpush1.msra.mxu0 %v174
  %215 = vmatprep.subr.mxu0 0.0
  %216 = vmatpush1.msra.mxu0 %v173
  %217 = vmatprep.subr.mxu0 0.0
  %218 = vmatpush1.msra.mxu0 %v172
  %219 = vmatprep.subr.mxu0 0.0
  %220 = vmatpush1.msra.mxu0 %v171
  %221 = vmatprep.subr.mxu0 0.0
  %222 = vmatpush1.msra.mxu0 %v170
  %223 = vmatprep.subr.mxu0 0.0
  %224 = vmatpush1.msra.mxu0 %v169
  %225 = vmatprep.subr.mxu0 0.0
  %226 = vmatpush1.msra.mxu0 %v168
  %227 = vmatprep.subr.mxu0 0.0
  %228 = vmatpush1.msra.mxu0 %v167
  %229 = vmatprep.subr.mxu0 0.0
  %230 = vmatpush1.msra.mxu0 %v166
  %231 = vmatprep.subr.mxu0 0.0
  %232 = vmatpush1.msra.mxu0 %v165
  %233 = vmatprep.subr.mxu0 0.0
  %234 = vmatpush1.msra.mxu0 %v164
  %235 = vmatprep.subr.mxu0 0.0
  %236 = vmatpush2.msra.mxu0 %v195
  %237 = vmatprep.subr.mxu0 0.0
  %238 = vmatpush2.msra.mxu0 %v194
  %239 = vmatprep.subr.mxu0 0.0
  %240 = vmatpush2.msra.mxu0 %v193
  %241 = vmatprep.subr.mxu0 0.0
  %242 = vmatpush2.msra.mxu0 %v192
  %243 = vmatprep.subr.mxu0 0.0
  %244 = vmatpush2.msra.mxu0 %v191
  %245 = vmatprep.subr.mxu0 0.0
  %246 = vmatpush2.msra.mxu0 %v190
  %247 = vmatprep.subr.mxu0 0.0
  %248 = vmatpush2.msra.mxu0 %v189
  %249 = vmatprep.subr.mxu0 0.0
  %250 = vmatpush2.msra.mxu0 %v188
  %251 = vmatprep.subr.mxu0 0.0
  %252 = vmatpush2.msra.mxu0 %v187
  %253 = vmatprep.subr.mxu0 0.0
  %254 = vmatpush2.msra.mxu0 %v186
  %255 = vmatprep.subr.mxu0 0.0
  %256 = vmatpush2.msra.mxu0 %v185
  %257 = vmatprep.subr.mxu0 0.0
  %258 = vmatpush2.msra.mxu0 %v184
  %259 = vmatprep.subr.mxu0 0.0
  %260 = vmatpush2.msra.mxu0 %v183
  %261 = vmatprep.subr.mxu0 0.0
  %262 = vmatpush2.msra.mxu0 %v182
  %263 = vmatprep.subr.mxu0 0.0
  %264 = vmatpush2.msra.mxu0 %v181
  %265 = vmatprep.subr.mxu0 0.0
  %266 = vmatpush2.msra.mxu0 %v180
  %267 = vmatprep.mubr.f32.mxu0 %v47
  %268 = vmatmul.mubr.f32.gmra.mxu0 %v46
  %v269 = vpop.f32.mrf.mxu0
  %v270 = vadd.f32 %v201, %v269
  %v271 = vpop.f32.mrf.mxu0
  %272 = vmatprep.mubr.f32.mxu0 %v49
  %273 = vmatmul.mubr.f32.gmra.mxu0 %v48
  %v274 = vpop.f32.mrf.mxu0
  %v275 = vadd.f32 %v201, %v274
  %v276 = vpop.f32.mrf.mxu0
  %277 = vdwg.mxu0
  %v278 = vld [vmem:[%s3] sm:$0xff]
  %v279 = vld [vmem:[%s3 + $0x8] sm:$0xff]
  %v280 = vld [vmem:[%s3 + $0x10] sm:$0xff]
  %v281 = vld [vmem:[%s3 + $0x18] sm:$0xff]
  %v282 = vld [vmem:[%s3 + $0x20] sm:$0xff]
  %v283 = vld [vmem:[%s3 + $0x28] sm:$0xff]
  %v284 = vld [vmem:[%s3 + $0x30] sm:$0xff]
  %v285 = vld [vmem:[%s3 + $0x38] sm:$0xff]
  %v286 = vld [vmem:[%s3 + $0x40] sm:$0xff]
  %v287 = vld [vmem:[%s3 + $0x48] sm:$0xff]
  %v288 = vld [vmem:[%s3 + $0x50] sm:$0xff]
  %v289 = vld [vmem:[%s3 + $0x58] sm:$0xff]
  %v290 = vld [vmem:[%s3 + $0x60] sm:$0xff]
  %v291 = vld [vmem:[%s3 + $0x68] sm:$0xff]
  %v292 = vld [vmem:[%s3 + $0x70] sm:$0xff]
  %v293 = vld [vmem:[%s3 + $0x78] sm:$0xff]
  %v294 = vld [vmem:[%s3 + $0x80] sm:$0xff]
  %v295 = vld [vmem:[%s3 + $0x88] sm:$0xff]
  %v296 = vld [vmem:[%s3 + $0x90] sm:$0xff]
  %v297 = vld [vmem:[%s3 + $0x98] sm:$0xff]
  %v298 = vld [vmem:[%s3 + $0xa0] sm:$0xff]
  %v299 = vld [vmem:[%s3 + $0xa8] sm:$0xff]
  %v300 = vld [vmem:[%s3 + $0xb0] sm:$0xff]
  %v301 = vld [vmem:[%s3 + $0xb8] sm:$0xff]
  %v302 = vld [vmem:[%s3 + $0xc0] sm:$0xff]
  %v303 = vld [vmem:[%s3 + $0xc8] sm:$0xff]
  %v304 = vld [vmem:[%s3 + $0xd0] sm:$0xff]
  %v305 = vld [vmem:[%s3 + $0xd8] sm:$0xff]
  %v306 = vld [vmem:[%s3 + $0xe0] sm:$0xff]
  %v307 = vld [vmem:[%s3 + $0xe8] sm:$0xff]
  %v308 = vld [vmem:[%s3 + $0xf0] sm:$0xff]
  %v309 = vld [vmem:[%s3 + $0xf8] sm:$0xff]
  %v310 = vld [vmem:[%s6] sm:$0x1]
  %v312 = vlaneseq
  %v313 = vshrl.u32 %v312, 7
  %v314 = vsub.s32 0, %v313
  %v315 = vrot.slane %v310, %v314
  %317 = vmatprep.subr.mxu0 0.0
  %318 = vmatpush1.msra.mxu0 %v293
  %319 = vmatprep.subr.mxu0 0.0
  %320 = vmatpush1.msra.mxu0 %v292
  %321 = vmatprep.subr.mxu0 0.0
  %322 = vmatpush1.msra.mxu0 %v291
  %323 = vmatprep.subr.mxu0 0.0
  %324 = vmatpush1.msra.mxu0 %v290
  %325 = vmatprep.subr.mxu0 0.0
  %326 = vmatpush1.msra.mxu0 %v289
  %327 = vmatprep.subr.mxu0 0.0
  %328 = vmatpush1.msra.mxu0 %v288
  %329 = vmatprep.subr.mxu0 0.0
  %330 = vmatpush1.msra.mxu0 %v287
  %331 = vmatprep.subr.mxu0 0.0
  %332 = vmatpush1.msra.mxu0 %v286
  %333 = vmatprep.subr.mxu0 0.0
  %334 = vmatpush1.msra.mxu0 %v285
  %335 = vmatprep.subr.mxu0 0.0
  %336 = vmatpush1.msra.mxu0 %v284
  %337 = vmatprep.subr.mxu0 0.0
  %338 = vmatpush1.msra.mxu0 %v283
  %339 = vmatprep.subr.mxu0 0.0
  %340 = vmatpush1.msra.mxu0 %v282
  %341 = vmatprep.subr.mxu0 0.0
  %342 = vmatpush1.msra.mxu0 %v281
  %343 = vmatprep.subr.mxu0 0.0
  %344 = vmatpush1.msra.mxu0 %v280
  %345 = vmatprep.subr.mxu0 0.0
  %346 = vmatpush1.msra.mxu0 %v279
  %347 = vmatprep.subr.mxu0 0.0
  %348 = vmatpush1.msra.mxu0 %v278
  %349 = vmatprep.subr.mxu0 0.0
  %350 = vmatpush2.msra.mxu0 %v309
  %351 = vmatprep.subr.mxu0 0.0
  %352 = vmatpush2.msra.mxu0 %v308
  %353 = vmatprep.subr.mxu0 0.0
  %354 = vmatpush2.msra.mxu0 %v307
  %355 = vmatprep.subr.mxu0 0.0
  %356 = vmatpush2.msra.mxu0 %v306
  %357 = vmatprep.subr.mxu0 0.0
  %358 = vmatpush2.msra.mxu0 %v305
  %359 = vmatprep.subr.mxu0 0.0
  %360 = vmatpush2.msra.mxu0 %v304
  %361 = vmatprep.subr.mxu0 0.0
  %362 = vmatpush2.msra.mxu0 %v303
  %363 = vmatprep.subr.mxu0 0.0
  %364 = vmatpush2.msra.mxu0 %v302
  %365 = vmatprep.subr.mxu0 0.0
  %366 = vmatpush2.msra.mxu0 %v301
  %367 = vmatprep.subr.mxu0 0.0
  %368 = vmatpush2.msra.mxu0 %v300
  %369 = vmatprep.subr.mxu0 0.0
  %370 = vmatpush2.msra.mxu0 %v299
  %371 = vmatprep.subr.mxu0 0.0
  %372 = vmatpush2.msra.mxu0 %v298
  %373 = vmatprep.subr.mxu0 0.0
  %374 = vmatpush2.msra.mxu0 %v297
  %375 = vmatprep.subr.mxu0 0.0
  %376 = vmatpush2.msra.mxu0 %v296
  %377 = vmatprep.subr.mxu0 0.0
  %378 = vmatpush2.msra.mxu0 %v295
  %379 = vmatprep.subr.mxu0 0.0
  %380 = vmatpush2.msra.mxu0 %v294
  %381 = vmatprep.mubr.f32.mxu0 %v47
  %382 = vmatmul.mubr.f32.gmra.mxu0 %v46
  %v383 = vpop.f32.mrf.mxu0
  %v384 = vadd.f32 %v315, %v383
  %v385 = vpop.f32.mrf.mxu0
  %386 = vmatprep.mubr.f32.mxu0 %v49
  %387 = vmatmul.mubr.f32.gmra.mxu0 %v48
  %v388 = vpop.f32.mrf.mxu0
  %v389 = vadd.f32 %v315, %v388
  %v390 = vpop.f32.mrf.mxu0
  %391 = vdwg.mxu0
  %v392 = vld [vmem:[%s7] sm:$0xff]
  %v393 = vld [vmem:[%s7 + $0x8] sm:$0xff]
  %v394 = vld [vmem:[%s7 + $0x10] sm:$0xff]
  %v395 = vld [vmem:[%s7 + $0x18] sm:$0xff]
  %v396 = vld [vmem:[%s7 + $0x20] sm:$0xff]
  %v397 = vld [vmem:[%s7 + $0x28] sm:$0xff]
  %v398 = vld [vmem:[%s7 + $0x30] sm:$0xff]
  %v399 = vld [vmem:[%s7 + $0x38] sm:$0xff]
  %v400 = vld [vmem:[%s8] sm:$0xff]
  %v401 = vld [vmem:[%s8 + $0x8] sm:$0xff]
  %v402 = vld [vmem:[%s8 + $0x10] sm:$0xff]
  %v403 = vld [vmem:[%s8 + $0x18] sm:$0xff]
  %v404 = vld [vmem:[%s8 + $0x20] sm:$0xff]
  %v405 = vld [vmem:[%s8 + $0x28] sm:$0xff]
  %v406 = vld [vmem:[%s8 + $0x30] sm:$0xff]
  %v407 = vld [vmem:[%s8 + $0x38] sm:$0xff]
  %v408 = vld [vmem:[%s9] sm:$0xff]
  %v409 = vld [vmem:[%s9 + $0x8] sm:$0xff]
  %v410 = vld [vmem:[%s9 + $0x10] sm:$0xff]
  %v411 = vld [vmem:[%s9 + $0x18] sm:$0xff]
  %v412 = vld [vmem:[%s9 + $0x20] sm:$0xff]
  %v413 = vld [vmem:[%s9 + $0x28] sm:$0xff]
  %v414 = vld [vmem:[%s9 + $0x30] sm:$0xff]
  %v415 = vld [vmem:[%s9 + $0x38] sm:$0xff]
  %v416 = vld [vmem:[%s10] sm:$0x1]
  %v418 = vlaneseq
  %v419 = vshrl.u32 %v418, 7
  %v420 = vsub.s32 0, %v419
  %v421 = vrot.slane %v416, %v420
  %vm423 = vcmask 523264
  %v425 = vsel %vm423, 0.0, 0
  %427 = vmatprep.subr.mxu0 0.0
  %428 = vmatpush1.msra.mxu0 0.0
  %429 = vmatprep.subr.mxu0 0.0
  %430 = vmatpush1.msra.mxu0 0.0
  %431 = vmatprep.subr.mxu0 0.0
  %432 = vmatpush1.msra.mxu0 0.0
  %433 = vmatprep.subr.mxu0 0.0
  %434 = vmatpush1.msra.mxu0 0.0
  %435 = vmatprep.subr.mxu0 0.0
  %436 = vmatpush1.msra.mxu0 0.0
  %437 = vmatprep.subr.mxu0 0.0
  %438 = vmatpush1.msra.mxu0 0.0
  %439 = vmatprep.subr.mxu0 0.0
  %440 = vmatpush1.msra.mxu0 0.0
  %441 = vmatprep.subr.mxu0 0.0
  %442 = vmatpush1.msra.mxu0 0.0
  %443 = vmatprep.subr.mxu0 0.0
  %444 = vmatpush1.msra.mxu0 %v399
  %445 = vmatprep.subr.mxu0 0.0
  %446 = vmatpush1.msra.mxu0 %v398
  %447 = vmatprep.subr.mxu0 0.0
  %448 = vmatpush1.msra.mxu0 %v397
  %449 = vmatprep.subr.mxu0 0.0
  %450 = vmatpush1.msra.mxu0 %v396
  %451 = vmatprep.subr.mxu0 0.0
  %452 = vmatpush1.msra.mxu0 %v395
  %453 = vmatprep.subr.mxu0 0.0
  %454 = vmatpush1.msra.mxu0 %v394
  %455 = vmatprep.subr.mxu0 0.0
  %456 = vmatpush1.msra.mxu0 %v393
  %457 = vmatprep.subr.mxu0 0.0
  %458 = vmatpush1.msra.mxu0 %v392
  %459 = vmatprep.subr.mxu0 0.0
  %460 = vmatpush2.msra.mxu0 0.0
  %461 = vmatprep.subr.mxu0 0.0
  %462 = vmatpush2.msra.mxu0 0.0
  %463 = vmatprep.subr.mxu0 0.0
  %464 = vmatpush2.msra.mxu0 0.0
  %465 = vmatprep.subr.mxu0 0.0
  %466 = vmatpush2.msra.mxu0 0.0
  %467 = vmatprep.subr.mxu0 0.0
  %468 = vmatpush2.msra.mxu0 0.0
  %469 = vmatprep.subr.mxu0 0.0
  %470 = vmatpush2.msra.mxu0 0.0
  %471 = vmatprep.subr.mxu0 0.0
  %472 = vmatpush2.msra.mxu0 0.0
  %473 = vmatprep.subr.mxu0 0.0
  %474 = vmatpush2.msra.mxu0 0.0
  %475 = vmatprep.subr.mxu0 0.0
  %476 = vmatpush2.msra.mxu0 0.0
  %477 = vmatprep.subr.mxu0 0.0
  %478 = vmatpush2.msra.mxu0 0.0
  %479 = vmatprep.subr.mxu0 0.0
  %480 = vmatpush2.msra.mxu0 0.0
  %481 = vmatprep.subr.mxu0 0.0
  %482 = vmatpush2.msra.mxu0 0.0
  %483 = vmatprep.subr.mxu0 0.0
  %484 = vmatpush2.msra.mxu0 0.0
  %485 = vmatprep.subr.mxu0 0.0
  %486 = vmatpush2.msra.mxu0 0.0
  %487 = vmatprep.subr.mxu0 0.0
  %488 = vmatpush2.msra.mxu0 0.0
  %489 = vmatprep.subr.mxu0 0.0
  %490 = vmatpush2.msra.mxu0 0.0
  %491 = vmatprep.mubr.f32.mxu0 0.0
  %492 = vmatmul.mubr.f32.gmra.mxu0 %v425
  %v493 = vpop.f32.mrf.mxu0
  %v494 = vadd.f32 0.0, %v493
  %v495 = vpop.f32.mrf.mxu0
  %496 = vdwg.mxu0
  %497 = vmatprep.subr.mxu0 0.0
  %498 = vmatpush1.msra.mxu0 0.0
  %499 = vmatprep.subr.mxu0 0.0
  %500 = vmatpush1.msra.mxu0 0.0
  %501 = vmatprep.subr.mxu0 0.0
  %502 = vmatpush1.msra.mxu0 0.0
  %503 = vmatprep.subr.mxu0 0.0
  %504 = vmatpush1.msra.mxu0 0.0
  %505 = vmatprep.subr.mxu0 0.0
  %506 = vmatpush1.msra.mxu0 0.0
  %507 = vmatprep.subr.mxu0 0.0
  %508 = vmatpush1.msra.mxu0 0.0
  %509 = vmatprep.subr.mxu0 0.0
  %510 = vmatpush1.msra.mxu0 0.0
  %511 = vmatprep.subr.mxu0 0.0
  %512 = vmatpush1.msra.mxu0 0.0
  %513 = vmatprep.subr.mxu0 0.0
  %514 = vmatpush1.msra.mxu0 %v407
  %515 = vmatprep.subr.mxu0 0.0
  %516 = vmatpush1.msra.mxu0 %v406
  %517 = vmatprep.subr.mxu0 0.0
  %518 = vmatpush1.msra.mxu0 %v405
  %519 = vmatprep.subr.mxu0 0.0
  %520 = vmatpush1.msra.mxu0 %v404
  %521 = vmatprep.subr.mxu0 0.0
  %522 = vmatpush1.msra.mxu0 %v403
  %523 = vmatprep.subr.mxu0 0.0
  %524 = vmatpush1.msra.mxu0 %v402
  %525 = vmatprep.subr.mxu0 0.0
  %526 = vmatpush1.msra.mxu0 %v401
  %527 = vmatprep.subr.mxu0 0.0
  %528 = vmatpush1.msra.mxu0 %v400
  %529 = vmatprep.subr.mxu0 0.0
  %530 = vmatpush2.msra.mxu0 0.0
  %531 = vmatprep.subr.mxu0 0.0
  %532 = vmatpush2.msra.mxu0 0.0
  %533 = vmatprep.subr.mxu0 0.0
  %534 = vmatpush2.msra.mxu0 0.0
  %535 = vmatprep.subr.mxu0 0.0
  %536 = vmatpush2.msra.mxu0 0.0
  %537 = vmatprep.subr.mxu0 0.0
  %538 = vmatpush2.msra.mxu0 0.0
  %539 = vmatprep.subr.mxu0 0.0
  %540 = vmatpush2.msra.mxu0 0.0
  %541 = vmatprep.subr.mxu0 0.0
  %542 = vmatpush2.msra.mxu0 0.0
  %543 = vmatprep.subr.mxu0 0.0
  %544 = vmatpush2.msra.mxu0 0.0
  %545 = vmatprep.subr.mxu0 0.0
  %546 = vmatpush2.msra.mxu0 0.0
  %547 = vmatprep.subr.mxu0 0.0
  %548 = vmatpush2.msra.mxu0 0.0
  %549 = vmatprep.subr.mxu0 0.0
  %550 = vmatpush2.msra.mxu0 0.0
  %551 = vmatprep.subr.mxu0 0.0
  %552 = vmatpush2.msra.mxu0 0.0
  %553 = vmatprep.subr.mxu0 0.0
  %554 = vmatpush2.msra.mxu0 0.0
  %555 = vmatprep.subr.mxu0 0.0
  %556 = vmatpush2.msra.mxu0 0.0
  %557 = vmatprep.subr.mxu0 0.0
  %558 = vmatpush2.msra.mxu0 0.0
  %559 = vmatprep.subr.mxu0 0.0
  %560 = vmatpush2.msra.mxu0 0.0
  %561 = vmatprep.mubr.f32.mxu0 0.0
  %562 = vmatmul.mubr.f32.gmra.mxu0 %v425
  %v563 = vpop.f32.mrf.mxu0
  %v564 = vadd.f32 0.0, %v563
  %v565 = vpop.f32.mrf.mxu0
  %566 = vdwg.mxu0
  %v567 = vadd.f32 %v156, %v494
  %v568 = vxor.u32 %v567, 2147483648
  %v569 = vmul.f32 %v568, 1.442695
  %v570 = vpow.pop %v569
  %v571 = vadd.f32 %v570, 1.0
  %v572 = vrcp.pop %v571
  %v573 = vmul.f32 1.0, %v572
  %v574 = vadd.f32 %v270, %v564
  %v575 = vxor.u32 %v574, 2147483648
  %v576 = vmul.f32 %v575, 1.442695
  %v577 = vpow.pop %v576
  %v578 = vadd.f32 %v577, 1.0
  %v579 = vrcp.pop %v578
  %v580 = vmul.f32 1.0, %v579
  %581 = vmatprep.subr.mxu0 0.0
  %582 = vmatpush1.msra.mxu0 0.0
  %583 = vmatprep.subr.mxu0 0.0
  %584 = vmatpush1.msra.mxu0 0.0
  %585 = vmatprep.subr.mxu0 0.0
  %586 = vmatpush1.msra.mxu0 0.0
  %587 = vmatprep.subr.mxu0 0.0
  %588 = vmatpush1.msra.mxu0 0.0
  %589 = vmatprep.subr.mxu0 0.0
  %590 = vmatpush1.msra.mxu0 0.0
  %591 = vmatprep.subr.mxu0 0.0
  %592 = vmatpush1.msra.mxu0 0.0
  %593 = vmatprep.subr.mxu0 0.0
  %594 = vmatpush1.msra.mxu0 0.0
  %595 = vmatprep.subr.mxu0 0.0
  %596 = vmatpush1.msra.mxu0 0.0
  %597 = vmatprep.subr.mxu0 0.0
  %598 = vmatpush1.msra.mxu0 %v415
  %599 = vmatprep.subr.mxu0 0.0
  %600 = vmatpush1.msra.mxu0 %v414
  %601 = vmatprep.subr.mxu0 0.0
  %602 = vmatpush1.msra.mxu0 %v413
  %603 = vmatprep.subr.mxu0 0.0
  %604 = vmatpush1.msra.mxu0 %v412
  %605 = vmatprep.subr.mxu0 0.0
  %606 = vmatpush1.msra.mxu0 %v411
  %607 = vmatprep.subr.mxu0 0.0
  %608 = vmatpush1.msra.mxu0 %v410
  %609 = vmatprep.subr.mxu0 0.0
  %610 = vmatpush1.msra.mxu0 %v409
  %611 = vmatprep.subr.mxu0 0.0
  %612 = vmatpush1.msra.mxu0 %v408
  %613 = vmatprep.subr.mxu0 0.0
  %614 = vmatpush2.msra.mxu0 0.0
  %615 = vmatprep.subr.mxu0 0.0
  %616 = vmatpush2.msra.mxu0 0.0
  %617 = vmatprep.subr.mxu0 0.0
  %618 = vmatpush2.msra.mxu0 0.0
  %619 = vmatprep.subr.mxu0 0.0
  %620 = vmatpush2.msra.mxu0 0.0
  %621 = vmatprep.subr.mxu0 0.0
  %622 = vmatpush2.msra.mxu0 0.0
  %623 = vmatprep.subr.mxu0 0.0
  %624 = vmatpush2.msra.mxu0 0.0
  %625 = vmatprep.subr.mxu0 0.0
  %626 = vmatpush2.msra.mxu0 0.0
  %627 = vmatprep.subr.mxu0 0.0
  %628 = vmatpush2.msra.mxu0 0.0
  %629 = vmatprep.subr.mxu0 0.0
  %630 = vmatpush2.msra.mxu0 0.0
  %631 = vmatprep.subr.mxu0 0.0
  %632 = vmatpush2.msra.mxu0 0.0
  %633 = vmatprep.subr.mxu0 0.0
  %634 = vmatpush2.msra.mxu0 0.0
  %635 = vmatprep.subr.mxu0 0.0
  %636 = vmatpush2.msra.mxu0 0.0
  %637 = vmatprep.subr.mxu0 0.0
  %638 = vmatpush2.msra.mxu0 0.0
  %639 = vmatprep.subr.mxu0 0.0
  %640 = vmatpush2.msra.mxu0 0.0
  %641 = vmatprep.subr.mxu0 0.0
  %642 = vmatpush2.msra.mxu0 0.0
  %643 = vmatprep.subr.mxu0 0.0
  %644 = vmatpush2.msra.mxu0 0.0
  %645 = vmatprep.mubr.f32.mxu0 0.0
  %646 = vmatmul.mubr.f32.gmra.mxu0 %v425
  %v647 = vpop.f32.mrf.mxu0
  %v648 = vadd.f32 %v421, %v647
  %v649 = vpop.f32.mrf.mxu0
  %650 = vdwg.mxu0
  %v651 = vmul.f32 %v573, %v648
  %v652 = vadd.f32 %v384, %v651
  %v653 = vtanh.pop %v652
  %v654 = vsub.f32 1.0, %v580
  %v655 = vmul.f32 %v654, %v653
  %v656 = vmul.f32 %v580, 0.0
  %v657 = vadd.f32 %v655, %v656
  %v659 = vsel %vm423, %v657, 0
  %661 = vmatprep.subr.mxu0 0.0
  %662 = vmatpush1.msra.mxu0 0.0
  %663 = vmatprep.subr.mxu0 0.0
  %664 = vmatpush1.msra.mxu0 0.0
  %665 = vmatprep.subr.mxu0 0.0
  %666 = vmatpush1.msra.mxu0 0.0
  %667 = vmatprep.subr.mxu0 0.0
  %668 = vmatpush1.msra.mxu0 0.0
  %669 = vmatprep.subr.mxu0 0.0
  %670 = vmatpush1.msra.mxu0 0.0
  %671 = vmatprep.subr.mxu0 0.0
  %672 = vmatpush1.msra.mxu0 0.0
  %673 = vmatprep.subr.mxu0 0.0
  %674 = vmatpush1.msra.mxu0 0.0
  %675 = vmatprep.subr.mxu0 0.0
  %676 = vmatpush1.msra.mxu0 0.0
  %677 = vmatprep.subr.mxu0 0.0
  %678 = vmatpush1.msra.mxu0 %v399
  %679 = vmatprep.subr.mxu0 0.0
  %680 = vmatpush1.msra.mxu0 %v398
  %681 = vmatprep.subr.mxu0 0.0
  %682 = vmatpush1.msra.mxu0 %v397
  %683 = vmatprep.subr.mxu0 0.0
  %684 = vmatpush1.msra.mxu0 %v396
  %685 = vmatprep.subr.mxu0 0.0
  %686 = vmatpush1.msra.mxu0 %v395
  %687 = vmatprep.subr.mxu0 0.0
  %688 = vmatpush1.msra.mxu0 %v394
  %689 = vmatprep.subr.mxu0 0.0
  %690 = vmatpush1.msra.mxu0 %v393
  %691 = vmatprep.subr.mxu0 0.0
  %692 = vmatpush1.msra.mxu0 %v392
  %693 = vmatprep.subr.mxu0 0.0
  %694 = vmatpush2.msra.mxu0 0.0
  %695 = vmatprep.subr.mxu0 0.0
  %696 = vmatpush2.msra.mxu0 0.0
  %697 = vmatprep.subr.mxu0 0.0
  %698 = vmatpush2.msra.mxu0 0.0
  %699 = vmatprep.subr.mxu0 0.0
  %700 = vmatpush2.msra.mxu0 0.0
  %701 = vmatprep.subr.mxu0 0.0
  %702 = vmatpush2.msra.mxu0 0.0
  %703 = vmatprep.subr.mxu0 0.0
  %704 = vmatpush2.msra.mxu0 0.0
  %705 = vmatprep.subr.mxu0 0.0
  %706 = vmatpush2.msra.mxu0 0.0
  %707 = vmatprep.subr.mxu0 0.0
  %708 = vmatpush2.msra.mxu0 0.0
  %709 = vmatprep.subr.mxu0 0.0
  %710 = vmatpush2.msra.mxu0 0.0
  %711 = vmatprep.subr.mxu0 0.0
  %712 = vmatpush2.msra.mxu0 0.0
  %713 = vmatprep.subr.mxu0 0.0
  %714 = vmatpush2.msra.mxu0 0.0
  %715 = vmatprep.subr.mxu0 0.0
  %716 = vmatpush2.msra.mxu0 0.0
  %717 = vmatprep.subr.mxu0 0.0
  %718 = vmatpush2.msra.mxu0 0.0
  %719 = vmatprep.subr.mxu0 0.0
  %720 = vmatpush2.msra.mxu0 0.0
  %721 = vmatprep.subr.mxu0 0.0
  %722 = vmatpush2.msra.mxu0 0.0
  %723 = vmatprep.subr.mxu0 0.0
  %724 = vmatpush2.msra.mxu0 0.0
  %725 = vmatprep.mubr.f32.mxu0 0.0
  %726 = vmatmul.mubr.f32.gmra.mxu0 %v659
  %v727 = vpop.f32.mrf.mxu0
  %v728 = vadd.f32 0.0, %v727
  %v729 = vpop.f32.mrf.mxu0
  %730 = vdwg.mxu0
  %731 = vmatprep.subr.mxu0 0.0
  %732 = vmatpush1.msra.mxu0 0.0
  %733 = vmatprep.subr.mxu0 0.0
  %734 = vmatpush1.msra.mxu0 0.0
  %735 = vmatprep.subr.mxu0 0.0
  %736 = vmatpush1.msra.mxu0 0.0
  %737 = vmatprep.subr.mxu0 0.0
  %738 = vmatpush1.msra.mxu0 0.0
  %739 = vmatprep.subr.mxu0 0.0
  %740 = vmatpush1.msra.mxu0 0.0
  %741 = vmatprep.subr.mxu0 0.0
  %742 = vmatpush1.msra.mxu0 0.0
  %743 = vmatprep.subr.mxu0 0.0
  %744 = vmatpush1.msra.mxu0 0.0
  %745 = vmatprep.subr.mxu0 0.0
  %746 = vmatpush1.msra.mxu0 0.0
  %747 = vmatprep.subr.mxu0 0.0
  %748 = vmatpush1.msra.mxu0 %v407
  %749 = vmatprep.subr.mxu0 0.0
  %750 = vmatpush1.msra.mxu0 %v406
  %751 = vmatprep.subr.mxu0 0.0
  %752 = vmatpush1.msra.mxu0 %v405
  %753 = vmatprep.subr.mxu0 0.0
  %754 = vmatpush1.msra.mxu0 %v404
  %755 = vmatprep.subr.mxu0 0.0
  %756 = vmatpush1.msra.mxu0 %v403
  %757 = vmatprep.subr.mxu0 0.0
  %758 = vmatpush1.msra.mxu0 %v402
  %759 = vmatprep.subr.mxu0 0.0
  %760 = vmatpush1.msra.mxu0 %v401
  %761 = vmatprep.subr.mxu0 0.0
  %762 = vmatpush1.msra.mxu0 %v400
  %763 = vmatprep.subr.mxu0 0.0
  %764 = vmatpush2.msra.mxu0 0.0
  %765 = vmatprep.subr.mxu0 0.0
  %766 = vmatpush2.msra.mxu0 0.0
  %767 = vmatprep.subr.mxu0 0.0
  %768 = vmatpush2.msra.mxu0 0.0
  %769 = vmatprep.subr.mxu0 0.0
  %770 = vmatpush2.msra.mxu0 0.0
  %771 = vmatprep.subr.mxu0 0.0
  %772 = vmatpush2.msra.mxu0 0.0
  %773 = vmatprep.subr.mxu0 0.0
  %774 = vmatpush2.msra.mxu0 0.0
  %775 = vmatprep.subr.mxu0 0.0
  %776 = vmatpush2.msra.mxu0 0.0
  %777 = vmatprep.subr.mxu0 0.0
  %778 = vmatpush2.msra.mxu0 0.0
  %779 = vmatprep.subr.mxu0 0.0
  %780 = vmatpush2.msra.mxu0 0.0
  %781 = vmatprep.subr.mxu0 0.0
  %782 = vmatpush2.msra.mxu0 0.0
  %783 = vmatprep.subr.mxu0 0.0
  %784 = vmatpush2.msra.mxu0 0.0
  %785 = vmatprep.subr.mxu0 0.0
  %786 = vmatpush2.msra.mxu0 0.0
  %787 = vmatprep.subr.mxu0 0.0
  %788 = vmatpush2.msra.mxu0 0.0
  %789 = vmatprep.subr.mxu0 0.0
  %790 = vmatpush2.msra.mxu0 0.0
  %791 = vmatprep.subr.mxu0 0.0
  %792 = vmatpush2.msra.mxu0 0.0
  %793 = vmatprep.subr.mxu0 0.0
  %794 = vmatpush2.msra.mxu0 0.0
  %795 = vmatprep.mubr.f32.mxu0 0.0
  %796 = vmatmul.mubr.f32.gmra.mxu0 %v659
  %v797 = vpop.f32.mrf.mxu0
  %v798 = vadd.f32 0.0, %v797
  %v799 = vpop.f32.mrf.mxu0
  %800 = vdwg.mxu0
  %v802 = vrot.slane %v728, 6
  %v804 = vadd.f32 %v156, %v802
  %v805 = vxor.u32 %v804, 2147483648
  %v806 = vmul.f32 %v805, 1.442695
  %v807 = vpow.pop %v806
  %v808 = vadd.f32 %v807, 1.0
  %v809 = vrcp.pop %v808
  %v810 = vmul.f32 1.0, %v809
  %v812 = vrot.slane %v798, 6
  %v814 = vadd.f32 %v270, %v812
  %v815 = vxor.u32 %v814, 2147483648
  %v816 = vmul.f32 %v815, 1.442695
  %v817 = vpow.pop %v816
  %v818 = vadd.f32 %v817, 1.0
  %v819 = vrcp.pop %v818
  %v820 = vmul.f32 1.0, %v819
  %821 = vmatprep.subr.mxu0 0.0
  %822 = vmatpush1.msra.mxu0 0.0
  %823 = vmatprep.subr.mxu0 0.0
  %824 = vmatpush1.msra.mxu0 0.0
  %825 = vmatprep.subr.mxu0 0.0
  %826 = vmatpush1.msra.mxu0 0.0
  %827 = vmatprep.subr.mxu0 0.0
  %828 = vmatpush1.msra.mxu0 0.0
  %829 = vmatprep.subr.mxu0 0.0
  %830 = vmatpush1.msra.mxu0 0.0
  %831 = vmatprep.subr.mxu0 0.0
  %832 = vmatpush1.msra.mxu0 0.0
  %833 = vmatprep.subr.mxu0 0.0
  %834 = vmatpush1.msra.mxu0 0.0
  %835 = vmatprep.subr.mxu0 0.0
  %836 = vmatpush1.msra.mxu0 0.0
  %837 = vmatprep.subr.mxu0 0.0
  %838 = vmatpush1.msra.mxu0 %v415
  %839 = vmatprep.subr.mxu0 0.0
  %840 = vmatpush1.msra.mxu0 %v414
  %841 = vmatprep.subr.mxu0 0.0
  %842 = vmatpush1.msra.mxu0 %v413
  %843 = vmatprep.subr.mxu0 0.0
  %844 = vmatpush1.msra.mxu0 %v412
  %845 = vmatprep.subr.mxu0 0.0
  %846 = vmatpush1.msra.mxu0 %v411
  %847 = vmatprep.subr.mxu0 0.0
  %848 = vmatpush1.msra.mxu0 %v410
  %849 = vmatprep.subr.mxu0 0.0
  %850 = vmatpush1.msra.mxu0 %v409
  %851 = vmatprep.subr.mxu0 0.0
  %852 = vmatpush1.msra.mxu0 %v408
  %853 = vmatprep.subr.mxu0 0.0
  %854 = vmatpush2.msra.mxu0 0.0
  %855 = vmatprep.subr.mxu0 0.0
  %856 = vmatpush2.msra.mxu0 0.0
  %857 = vmatprep.subr.mxu0 0.0
  %858 = vmatpush2.msra.mxu0 0.0
  %859 = vmatprep.subr.mxu0 0.0
  %860 = vmatpush2.msra.mxu0 0.0
  %861 = vmatprep.subr.mxu0 0.0
  %862 = vmatpush2.msra.mxu0 0.0
  %863 = vmatprep.subr.mxu0 0.0
  %864 = vmatpush2.msra.mxu0 0.0
  %865 = vmatprep.subr.mxu0 0.0
  %866 = vmatpush2.msra.mxu0 0.0
  %867 = vmatprep.subr.mxu0 0.0
  %868 = vmatpush2.msra.mxu0 0.0
  %869 = vmatprep.subr.mxu0 0.0
  %870 = vmatpush2.msra.mxu0 0.0
  %871 = vmatprep.subr.mxu0 0.0
  %872 = vmatpush2.msra.mxu0 0.0
  %873 = vmatprep.subr.mxu0 0.0
  %874 = vmatpush2.msra.mxu0 0.0
  %875 = vmatprep.subr.mxu0 0.0
  %876 = vmatpush2.msra.mxu0 0.0
  %877 = vmatprep.subr.mxu0 0.0
  %878 = vmatpush2.msra.mxu0 0.0
  %879 = vmatprep.subr.mxu0 0.0
  %880 = vmatpush2.msra.mxu0 0.0
  %881 = vmatprep.subr.mxu0 0.0
  %882 = vmatpush2.msra.mxu0 0.0
  %883 = vmatprep.subr.mxu0 0.0
  %884 = vmatpush2.msra.mxu0 0.0
  %885 = vmatprep.mubr.f32.mxu0 0.0
  %886 = vmatmul.mubr.f32.gmra.mxu0 %v659
  %v887 = vpop.f32.mrf.mxu0
  %v888 = vadd.f32 %v421, %v887
  %v889 = vpop.f32.mrf.mxu0
  %890 = vdwg.mxu0
  %v892 = vrot.slane %v888, 6
  %v894 = vmul.f32 %v810, %v892
  %v895 = vadd.f32 %v384, %v894
  %v896 = vtanh.pop %v895
  %v897 = vsub.f32 1.0, %v820
  %v898 = vmul.f32 %v897, %v896
  %v899 = vrot.slane %v657, 6
  %v901 = vmul.f32 %v820, %v899
  %v902 = vadd.f32 %v898, %v901
  %v904 = vrot.slane %v902, 2
  %v905 = vsel %vm423, %v904, 0
  %907 = vmatprep.subr.mxu0 0.0
  %908 = vmatpush1.msra.mxu0 0.0
  %909 = vmatprep.subr.mxu0 0.0
  %910 = vmatpush1.msra.mxu0 0.0
  %911 = vmatprep.subr.mxu0 0.0
  %912 = vmatpush1.msra.mxu0 0.0
  %913 = vmatprep.subr.mxu0 0.0
  %914 = vmatpush1.msra.mxu0 0.0
  %915 = vmatprep.subr.mxu0 0.0
  %916 = vmatpush1.msra.mxu0 0.0
  %917 = vmatprep.subr.mxu0 0.0
  %918 = vmatpush1.msra.mxu0 0.0
  %919 = vmatprep.subr.mxu0 0.0
  %920 = vmatpush1.msra.mxu0 0.0
  %921 = vmatprep.subr.mxu0 0.0
  %922 = vmatpush1.msra.mxu0 0.0
  %923 = vmatprep.subr.mxu0 0.0
  %924 = vmatpush1.msra.mxu0 %v399
  %925 = vmatprep.subr.mxu0 0.0
  %926 = vmatpush1.msra.mxu0 %v398
  %927 = vmatprep.subr.mxu0 0.0
  %928 = vmatpush1.msra.mxu0 %v397
  %929 = vmatprep.subr.mxu0 0.0
  %930 = vmatpush1.msra.mxu0 %v396
  %931 = vmatprep.subr.mxu0 0.0
  %932 = vmatpush1.msra.mxu0 %v395
  %933 = vmatprep.subr.mxu0 0.0
  %934 = vmatpush1.msra.mxu0 %v394
  %935 = vmatprep.subr.mxu0 0.0
  %936 = vmatpush1.msra.mxu0 %v393
  %937 = vmatprep.subr.mxu0 0.0
  %938 = vmatpush1.msra.mxu0 %v392
  %939 = vmatprep.subr.mxu0 0.0
  %940 = vmatpush2.msra.mxu0 0.0
  %941 = vmatprep.subr.mxu0 0.0
  %942 = vmatpush2.msra.mxu0 0.0
  %943 = vmatprep.subr.mxu0 0.0
  %944 = vmatpush2.msra.mxu0 0.0
  %945 = vmatprep.subr.mxu0 0.0
  %946 = vmatpush2.msra.mxu0 0.0
  %947 = vmatprep.subr.mxu0 0.0
  %948 = vmatpush2.msra.mxu0 0.0
  %949 = vmatprep.subr.mxu0 0.0
  %950 = vmatpush2.msra.mxu0 0.0
  %951 = vmatprep.subr.mxu0 0.0
  %952 = vmatpush2.msra.mxu0 0.0
  %953 = vmatprep.subr.mxu0 0.0
  %954 = vmatpush2.msra.mxu0 0.0
  %955 = vmatprep.subr.mxu0 0.0
  %956 = vmatpush2.msra.mxu0 0.0
  %957 = vmatprep.subr.mxu0 0.0
  %958 = vmatpush2.msra.mxu0 0.0
  %959 = vmatprep.subr.mxu0 0.0
  %960 = vmatpush2.msra.mxu0 0.0
  %961 = vmatprep.subr.mxu0 0.0
  %962 = vmatpush2.msra.mxu0 0.0
  %963 = vmatprep.subr.mxu0 0.0
  %964 = vmatpush2.msra.mxu0 0.0
  %965 = vmatprep.subr.mxu0 0.0
  %966 = vmatpush2.msra.mxu0 0.0
  %967 = vmatprep.subr.mxu0 0.0
  %968 = vmatpush2.msra.mxu0 0.0
  %969 = vmatprep.subr.mxu0 0.0
  %970 = vmatpush2.msra.mxu0 0.0
  %971 = vmatprep.mubr.f32.mxu0 0.0
  %972 = vmatmul.mubr.f32.gmra.mxu0 %v905
  %v973 = vpop.f32.mrf.mxu0
  %v974 = vadd.f32 0.0, %v973
  %v975 = vpop.f32.mrf.mxu0
  %976 = vdwg.mxu0
  %977 = vmatprep.subr.mxu0 0.0
  %978 = vmatpush1.msra.mxu0 0.0
  %979 = vmatprep.subr.mxu0 0.0
  %980 = vmatpush1.msra.mxu0 0.0
  %981 = vmatprep.subr.mxu0 0.0
  %982 = vmatpush1.msra.mxu0 0.0
  %983 = vmatprep.subr.mxu0 0.0
  %984 = vmatpush1.msra.mxu0 0.0
  %985 = vmatprep.subr.mxu0 0.0
  %986 = vmatpush1.msra.mxu0 0.0
  %987 = vmatprep.subr.mxu0 0.0
  %988 = vmatpush1.msra.mxu0 0.0
  %989 = vmatprep.subr.mxu0 0.0
  %990 = vmatpush1.msra.mxu0 0.0
  %991 = vmatprep.subr.mxu0 0.0
  %992 = vmatpush1.msra.mxu0 0.0
  %993 = vmatprep.subr.mxu0 0.0
  %994 = vmatpush1.msra.mxu0 %v407
  %995 = vmatprep.subr.mxu0 0.0
  %996 = vmatpush1.msra.mxu0 %v406
  %997 = vmatprep.subr.mxu0 0.0
  %998 = vmatpush1.msra.mxu0 %v405
  %999 = vmatprep.subr.mxu0 0.0
  %1000 = vmatpush1.msra.mxu0 %v404
  %1001 = vmatprep.subr.mxu0 0.0
  %1002 = vmatpush1.msra.mxu0 %v403
  %1003 = vmatprep.subr.mxu0 0.0
  %1004 = vmatpush1.msra.mxu0 %v402
  %1005 = vmatprep.subr.mxu0 0.0
  %1006 = vmatpush1.msra.mxu0 %v401
  %1007 = vmatprep.subr.mxu0 0.0
  %1008 = vmatpush1.msra.mxu0 %v400
  %1009 = vmatprep.subr.mxu0 0.0
  %1010 = vmatpush2.msra.mxu0 0.0
  %1011 = vmatprep.subr.mxu0 0.0
  %1012 = vmatpush2.msra.mxu0 0.0
  %1013 = vmatprep.subr.mxu0 0.0
  %1014 = vmatpush2.msra.mxu0 0.0
  %1015 = vmatprep.subr.mxu0 0.0
  %1016 = vmatpush2.msra.mxu0 0.0
  %1017 = vmatprep.subr.mxu0 0.0
  %1018 = vmatpush2.msra.mxu0 0.0
  %1019 = vmatprep.subr.mxu0 0.0
  %1020 = vmatpush2.msra.mxu0 0.0
  %1021 = vmatprep.subr.mxu0 0.0
  %1022 = vmatpush2.msra.mxu0 0.0
  %1023 = vmatprep.subr.mxu0 0.0
  %1024 = vmatpush2.msra.mxu0 0.0
  %1025 = vmatprep.subr.mxu0 0.0
  %1026 = vmatpush2.msra.mxu0 0.0
  %1027 = vmatprep.subr.mxu0 0.0
  %1028 = vmatpush2.msra.mxu0 0.0
  %1029 = vmatprep.subr.mxu0 0.0
  %1030 = vmatpush2.msra.mxu0 0.0
  %1031 = vmatprep.subr.mxu0 0.0
  %1032 = vmatpush2.msra.mxu0 0.0
  %1033 = vmatprep.subr.mxu0 0.0
  %1034 = vmatpush2.msra.mxu0 0.0
  %1035 = vmatprep.subr.mxu0 0.0
  %1036 = vmatpush2.msra.mxu0 0.0
  %1037 = vmatprep.subr.mxu0 0.0
  %1038 = vmatpush2.msra.mxu0 0.0
  %1039 = vmatprep.subr.mxu0 0.0
  %1040 = vmatpush2.msra.mxu0 0.0
  %1041 = vmatprep.mubr.f32.mxu0 0.0
  %1042 = vmatmul.mubr.f32.gmra.mxu0 %v905
  %v1043 = vpop.f32.mrf.mxu0
  %v1044 = vadd.f32 0.0, %v1043
  %v1045 = vpop.f32.mrf.mxu0
  %1046 = vdwg.mxu0
  %v1048 = vrot.slane %v974, 4
  %v1050 = vadd.f32 %v156, %v1048
  %v1051 = vxor.u32 %v1050, 2147483648
  %v1052 = vmul.f32 %v1051, 1.442695
  %v1053 = vpow.pop %v1052
  %v1054 = vadd.f32 %v1053, 1.0
  %v1055 = vrcp.pop %v1054
  %v1056 = vmul.f32 1.0, %v1055
  %v1058 = vrot.slane %v1044, 4
  %v1060 = vadd.f32 %v270, %v1058
  %v1061 = vxor.u32 %v1060, 2147483648
  %v1062 = vmul.f32 %v1061, 1.442695
  %v1063 = vpow.pop %v1062
  %v1064 = vadd.f32 %v1063, 1.0
  %v1065 = vrcp.pop %v1064
  %v1066 = vmul.f32 1.0, %v1065
  %1067 = vmatprep.subr.mxu0 0.0
  %1068 = vmatpush1.msra.mxu0 0.0
  %1069 = vmatprep.subr.mxu0 0.0
  %1070 = vmatpush1.msra.mxu0 0.0
  %1071 = vmatprep.subr.mxu0 0.0
  %1072 = vmatpush1.msra.mxu0 0.0
  %1073 = vmatprep.subr.mxu0 0.0
  %1074 = vmatpush1.msra.mxu0 0.0
  %1075 = vmatprep.subr.mxu0 0.0
  %1076 = vmatpush1.msra.mxu0 0.0
  %1077 = vmatprep.subr.mxu0 0.0
  %1078 = vmatpush1.msra.mxu0 0.0
  %1079 = vmatprep.subr.mxu0 0.0
  %1080 = vmatpush1.msra.mxu0 0.0
  %1081 = vmatprep.subr.mxu0 0.0
  %1082 = vmatpush1.msra.mxu0 0.0
  %1083 = vmatprep.subr.mxu0 0.0
  %1084 = vmatpush1.msra.mxu0 %v415
  %1085 = vmatprep.subr.mxu0 0.0
  %1086 = vmatpush1.msra.mxu0 %v414
  %1087 = vmatprep.subr.mxu0 0.0
  %1088 = vmatpush1.msra.mxu0 %v413
  %1089 = vmatprep.subr.mxu0 0.0
  %1090 = vmatpush1.msra.mxu0 %v412
  %1091 = vmatprep.subr.mxu0 0.0
  %1092 = vmatpush1.msra.mxu0 %v411
  %1093 = vmatprep.subr.mxu0 0.0
  %1094 = vmatpush1.msra.mxu0 %v410
  %1095 = vmatprep.subr.mxu0 0.0
  %1096 = vmatpush1.msra.mxu0 %v409
  %1097 = vmatprep.subr.mxu0 0.0
  %1098 = vmatpush1.msra.mxu0 %v408
  %1099 = vmatprep.subr.mxu0 0.0
  %1100 = vmatpush2.msra.mxu0 0.0
  %1101 = vmatprep.subr.mxu0 0.0
  %1102 = vmatpush2.msra.mxu0 0.0
  %1103 = vmatprep.subr.mxu0 0.0
  %1104 = vmatpush2.msra.mxu0 0.0
  %1105 = vmatprep.subr.mxu0 0.0
  %1106 = vmatpush2.msra.mxu0 0.0
  %1107 = vmatprep.subr.mxu0 0.0
  %1108 = vmatpush2.msra.mxu0 0.0
  %1109 = vmatprep.subr.mxu0 0.0
  %1110 = vmatpush2.msra.mxu0 0.0
  %1111 = vmatprep.subr.mxu0 0.0
  %1112 = vmatpush2.msra.mxu0 0.0
  %1113 = vmatprep.subr.mxu0 0.0
  %1114 = vmatpush2.msra.mxu0 0.0
  %1115 = vmatprep.subr.mxu0 0.0
  %1116 = vmatpush2.msra.mxu0 0.0
  %1117 = vmatprep.subr.mxu0 0.0
  %1118 = vmatpush2.msra.mxu0 0.0
  %1119 = vmatprep.subr.mxu0 0.0
  %1120 = vmatpush2.msra.mxu0 0.0
  %1121 = vmatprep.subr.mxu0 0.0
  %1122 = vmatpush2.msra.mxu0 0.0
  %1123 = vmatprep.subr.mxu0 0.0
  %1124 = vmatpush2.msra.mxu0 0.0
  %1125 = vmatprep.subr.mxu0 0.0
  %1126 = vmatpush2.msra.mxu0 0.0
  %1127 = vmatprep.subr.mxu0 0.0
  %1128 = vmatpush2.msra.mxu0 0.0
  %1129 = vmatprep.subr.mxu0 0.0
  %1130 = vmatpush2.msra.mxu0 0.0
  %1131 = vmatprep.mubr.f32.mxu0 0.0
  %1132 = vmatmul.mubr.f32.gmra.mxu0 %v905
  %v1133 = vpop.f32.mrf.mxu0
  %v1134 = vadd.f32 %v421, %v1133
  %v1135 = vpop.f32.mrf.mxu0
  %1136 = vdwg.mxu0
  %v1138 = vrot.slane %v1134, 4
  %v1140 = vmul.f32 %v1056, %v1138
  %v1141 = vadd.f32 %v384, %v1140
  %v1142 = vtanh.pop %v1141
  %v1143 = vsub.f32 1.0, %v1066
  %v1144 = vmul.f32 %v1143, %v1142
  %v1145 = vrot.slane %v902, 6
  %v1147 = vmul.f32 %v1066, %v1145
  %v1148 = vadd.f32 %v1144, %v1147
  %v1150 = vrot.slane %v1148, 4
  %v1151 = vsel %vm423, %v1150, 0
  %1153 = vmatprep.subr.mxu0 0.0
  %1154 = vmatpush1.msra.mxu0 0.0
  %1155 = vmatprep.subr.mxu0 0.0
  %1156 = vmatpush1.msra.mxu0 0.0
  %1157 = vmatprep.subr.mxu0 0.0
  %1158 = vmatpush1.msra.mxu0 0.0
  %1159 = vmatprep.subr.mxu0 0.0
  %1160 = vmatpush1.msra.mxu0 0.0
  %1161 = vmatprep.subr.mxu0 0.0
  %1162 = vmatpush1.msra.mxu0 0.0
  %1163 = vmatprep.subr.mxu0 0.0
  %1164 = vmatpush1.msra.mxu0 0.0
  %1165 = vmatprep.subr.mxu0 0.0
  %1166 = vmatpush1.msra.mxu0 0.0
  %1167 = vmatprep.subr.mxu0 0.0
  %1168 = vmatpush1.msra.mxu0 0.0
  %1169 = vmatprep.subr.mxu0 0.0
  %1170 = vmatpush1.msra.mxu0 %v399
  %1171 = vmatprep.subr.mxu0 0.0
  %1172 = vmatpush1.msra.mxu0 %v398
  %1173 = vmatprep.subr.mxu0 0.0
  %1174 = vmatpush1.msra.mxu0 %v397
  %1175 = vmatprep.subr.mxu0 0.0
  %1176 = vmatpush1.msra.mxu0 %v396
  %1177 = vmatprep.subr.mxu0 0.0
  %1178 = vmatpush1.msra.mxu0 %v395
  %1179 = vmatprep.subr.mxu0 0.0
  %1180 = vmatpush1.msra.mxu0 %v394
  %1181 = vmatprep.subr.mxu0 0.0
  %1182 = vmatpush1.msra.mxu0 %v393
  %1183 = vmatprep.subr.mxu0 0.0
  %1184 = vmatpush1.msra.mxu0 %v392
  %1185 = vmatprep.subr.mxu0 0.0
  %1186 = vmatpush2.msra.mxu0 0.0
  %1187 = vmatprep.subr.mxu0 0.0
  %1188 = vmatpush2.msra.mxu0 0.0
  %1189 = vmatprep.subr.mxu0 0.0
  %1190 = vmatpush2.msra.mxu0 0.0
  %1191 = vmatprep.subr.mxu0 0.0
  %1192 = vmatpush2.msra.mxu0 0.0
  %1193 = vmatprep.subr.mxu0 0.0
  %1194 = vmatpush2.msra.mxu0 0.0
  %1195 = vmatprep.subr.mxu0 0.0
  %1196 = vmatpush2.msra.mxu0 0.0
  %1197 = vmatprep.subr.mxu0 0.0
  %1198 = vmatpush2.msra.mxu0 0.0
  %1199 = vmatprep.subr.mxu0 0.0
  %1200 = vmatpush2.msra.mxu0 0.0
  %1201 = vmatprep.subr.mxu0 0.0
  %1202 = vmatpush2.msra.mxu0 0.0
  %1203 = vmatprep.subr.mxu0 0.0
  %1204 = vmatpush2.msra.mxu0 0.0
  %1205 = vmatprep.subr.mxu0 0.0
  %1206 = vmatpush2.msra.mxu0 0.0
  %1207 = vmatprep.subr.mxu0 0.0
  %1208 = vmatpush2.msra.mxu0 0.0
  %1209 = vmatprep.subr.mxu0 0.0
  %1210 = vmatpush2.msra.mxu0 0.0
  %1211 = vmatprep.subr.mxu0 0.0
  %1212 = vmatpush2.msra.mxu0 0.0
  %1213 = vmatprep.subr.mxu0 0.0
  %1214 = vmatpush2.msra.mxu0 0.0
  %1215 = vmatprep.subr.mxu0 0.0
  %1216 = vmatpush2.msra.mxu0 0.0
  %1217 = vmatprep.mubr.f32.mxu0 0.0
  %1218 = vmatmul.mubr.f32.gmra.mxu0 %v1151
  %v1219 = vpop.f32.mrf.mxu0
  %v1220 = vadd.f32 0.0, %v1219
  %v1221 = vpop.f32.mrf.mxu0
  %1222 = vdwg.mxu0
  %1223 = vmatprep.subr.mxu0 0.0
  %1224 = vmatpush1.msra.mxu0 0.0
  %1225 = vmatprep.subr.mxu0 0.0
  %1226 = vmatpush1.msra.mxu0 0.0
  %1227 = vmatprep.subr.mxu0 0.0
  %1228 = vmatpush1.msra.mxu0 0.0
  %1229 = vmatprep.subr.mxu0 0.0
  %1230 = vmatpush1.msra.mxu0 0.0
  %1231 = vmatprep.subr.mxu0 0.0
  %1232 = vmatpush1.msra.mxu0 0.0
  %1233 = vmatprep.subr.mxu0 0.0
  %1234 = vmatpush1.msra.mxu0 0.0
  %1235 = vmatprep.subr.mxu0 0.0
  %1236 = vmatpush1.msra.mxu0 0.0
  %1237 = vmatprep.subr.mxu0 0.0
  %1238 = vmatpush1.msra.mxu0 0.0
  %1239 = vmatprep.subr.mxu0 0.0
  %1240 = vmatpush1.msra.mxu0 %v407
  %1241 = vmatprep.subr.mxu0 0.0
  %1242 = vmatpush1.msra.mxu0 %v406
  %1243 = vmatprep.subr.mxu0 0.0
  %1244 = vmatpush1.msra.mxu0 %v405
  %1245 = vmatprep.subr.mxu0 0.0
  %1246 = vmatpush1.msra.mxu0 %v404
  %1247 = vmatprep.subr.mxu0 0.0
  %1248 = vmatpush1.msra.mxu0 %v403
  %1249 = vmatprep.subr.mxu0 0.0
  %1250 = vmatpush1.msra.mxu0 %v402
  %1251 = vmatprep.subr.mxu0 0.0
  %1252 = vmatpush1.msra.mxu0 %v401
  %1253 = vmatprep.subr.mxu0 0.0
  %1254 = vmatpush1.msra.mxu0 %v400
  %1255 = vmatprep.subr.mxu0 0.0
  %1256 = vmatpush2.msra.mxu0 0.0
  %1257 = vmatprep.subr.mxu0 0.0
  %1258 = vmatpush2.msra.mxu0 0.0
  %1259 = vmatprep.subr.mxu0 0.0
  %1260 = vmatpush2.msra.mxu0 0.0
  %1261 = vmatprep.subr.mxu0 0.0
  %1262 = vmatpush2.msra.mxu0 0.0
  %1263 = vmatprep.subr.mxu0 0.0
  %1264 = vmatpush2.msra.mxu0 0.0
  %1265 = vmatprep.subr.mxu0 0.0
  %1266 = vmatpush2.msra.mxu0 0.0
  %1267 = vmatprep.subr.mxu0 0.0
  %1268 = vmatpush2.msra.mxu0 0.0
  %1269 = vmatprep.subr.mxu0 0.0
  %1270 = vmatpush2.msra.mxu0 0.0
  %1271 = vmatprep.subr.mxu0 0.0
  %1272 = vmatpush2.msra.mxu0 0.0
  %1273 = vmatprep.subr.mxu0 0.0
  %1274 = vmatpush2.msra.mxu0 0.0
  %1275 = vmatprep.subr.mxu0 0.0
  %1276 = vmatpush2.msra.mxu0 0.0
  %1277 = vmatprep.subr.mxu0 0.0
  %1278 = vmatpush2.msra.mxu0 0.0
  %1279 = vmatprep.subr.mxu0 0.0
  %1280 = vmatpush2.msra.mxu0 0.0
  %1281 = vmatprep.subr.mxu0 0.0
  %1282 = vmatpush2.msra.mxu0 0.0
  %1283 = vmatprep.subr.mxu0 0.0
  %1284 = vmatpush2.msra.mxu0 0.0
  %1285 = vmatprep.subr.mxu0 0.0
  %1286 = vmatpush2.msra.mxu0 0.0
  %1287 = vmatprep.mubr.f32.mxu0 0.0
  %1288 = vmatmul.mubr.f32.gmra.mxu0 %v1151
  %v1289 = vpop.f32.mrf.mxu0
  %v1290 = vadd.f32 0.0, %v1289
  %v1291 = vpop.f32.mrf.mxu0
  %1292 = vdwg.mxu0
  %v1294 = vrot.slane %v1220, 2
  %v1296 = vadd.f32 %v156, %v1294
  %v1297 = vxor.u32 %v1296, 2147483648
  %v1298 = vmul.f32 %v1297, 1.442695
  %v1299 = vpow.pop %v1298
  %v1300 = vadd.f32 %v1299, 1.0
  %v1301 = vrcp.pop %v1300
  %v1302 = vmul.f32 1.0, %v1301
  %v1304 = vrot.slane %v1290, 2
  %v1306 = vadd.f32 %v270, %v1304
  %v1307 = vxor.u32 %v1306, 2147483648
  %v1308 = vmul.f32 %v1307, 1.442695
  %v1309 = vpow.pop %v1308
  %v1310 = vadd.f32 %v1309, 1.0
  %v1311 = vrcp.pop %v1310
  %v1312 = vmul.f32 1.0, %v1311
  %1313 = vmatprep.subr.mxu0 0.0
  %1314 = vmatpush1.msra.mxu0 0.0
  %1315 = vmatprep.subr.mxu0 0.0
  %1316 = vmatpush1.msra.mxu0 0.0
  %1317 = vmatprep.subr.mxu0 0.0
  %1318 = vmatpush1.msra.mxu0 0.0
  %1319 = vmatprep.subr.mxu0 0.0
  %1320 = vmatpush1.msra.mxu0 0.0
  %1321 = vmatprep.subr.mxu0 0.0
  %1322 = vmatpush1.msra.mxu0 0.0
  %1323 = vmatprep.subr.mxu0 0.0
  %1324 = vmatpush1.msra.mxu0 0.0
  %1325 = vmatprep.subr.mxu0 0.0
  %1326 = vmatpush1.msra.mxu0 0.0
  %1327 = vmatprep.subr.mxu0 0.0
  %1328 = vmatpush1.msra.mxu0 0.0
  %1329 = vmatprep.subr.mxu0 0.0
  %1330 = vmatpush1.msra.mxu0 %v415
  %1331 = vmatprep.subr.mxu0 0.0
  %1332 = vmatpush1.msra.mxu0 %v414
  %1333 = vmatprep.subr.mxu0 0.0
  %1334 = vmatpush1.msra.mxu0 %v413
  %1335 = vmatprep.subr.mxu0 0.0
  %1336 = vmatpush1.msra.mxu0 %v412
  %1337 = vmatprep.subr.mxu0 0.0
  %1338 = vmatpush1.msra.mxu0 %v411
  %1339 = vmatprep.subr.mxu0 0.0
  %1340 = vmatpush1.msra.mxu0 %v410
  %1341 = vmatprep.subr.mxu0 0.0
  %1342 = vmatpush1.msra.mxu0 %v409
  %1343 = vmatprep.subr.mxu0 0.0
  %1344 = vmatpush1.msra.mxu0 %v408
  %1345 = vmatprep.subr.mxu0 0.0
  %1346 = vmatpush2.msra.mxu0 0.0
  %1347 = vmatprep.subr.mxu0 0.0
  %1348 = vmatpush2.msra.mxu0 0.0
  %1349 = vmatprep.subr.mxu0 0.0
  %1350 = vmatpush2.msra.mxu0 0.0
  %1351 = vmatprep.subr.mxu0 0.0
  %1352 = vmatpush2.msra.mxu0 0.0
  %1353 = vmatprep.subr.mxu0 0.0
  %1354 = vmatpush2.msra.mxu0 0.0
  %1355 = vmatprep.subr.mxu0 0.0
  %1356 = vmatpush2.msra.mxu0 0.0
  %1357 = vmatprep.subr.mxu0 0.0
  %1358 = vmatpush2.msra.mxu0 0.0
  %1359 = vmatprep.subr.mxu0 0.0
  %1360 = vmatpush2.msra.mxu0 0.0
  %1361 = vmatprep.subr.mxu0 0.0
  %1362 = vmatpush2.msra.mxu0 0.0
  %1363 = vmatprep.subr.mxu0 0.0
  %1364 = vmatpush2.msra.mxu0 0.0
  %1365 = vmatprep.subr.mxu0 0.0
  %1366 = vmatpush2.msra.mxu0 0.0
  %1367 = vmatprep.subr.mxu0 0.0
  %1368 = vmatpush2.msra.mxu0 0.0
  %1369 = vmatprep.subr.mxu0 0.0
  %1370 = vmatpush2.msra.mxu0 0.0
  %1371 = vmatprep.subr.mxu0 0.0
  %1372 = vmatpush2.msra.mxu0 0.0
  %1373 = vmatprep.subr.mxu0 0.0
  %1374 = vmatpush2.msra.mxu0 0.0
  %1375 = vmatprep.subr.mxu0 0.0
  %1376 = vmatpush2.msra.mxu0 0.0
  %1377 = vmatprep.mubr.f32.mxu0 0.0
  %1378 = vmatmul.mubr.f32.gmra.mxu0 %v1151
  %v1379 = vpop.f32.mrf.mxu0
  %v1380 = vadd.f32 %v421, %v1379
  %v1381 = vpop.f32.mrf.mxu0
  %1382 = vdwg.mxu0
  %v1384 = vrot.slane %v1380, 2
  %v1386 = vmul.f32 %v1302, %v1384
  %v1387 = vadd.f32 %v384, %v1386
  %v1388 = vtanh.pop %v1387
  %v1389 = vsub.f32 1.0, %v1312
  %v1390 = vmul.f32 %v1389, %v1388
  %v1391 = vrot.slane %v1148, 6
  %v1393 = vmul.f32 %v1312, %v1391
  %v1394 = vadd.f32 %v1390, %v1393
  %v1396 = vrot.slane %v1394, 6
  %v1397 = vsel %vm423, %v1396, 0
  %1399 = vmatprep.subr.mxu0 0.0
  %1400 = vmatpush1.msra.mxu0 0.0
  %1401 = vmatprep.subr.mxu0 0.0
  %1402 = vmatpush1.msra.mxu0 0.0
  %1403 = vmatprep.subr.mxu0 0.0
  %1404 = vmatpush1.msra.mxu0 0.0
  %1405 = vmatprep.subr.mxu0 0.0
  %1406 = vmatpush1.msra.mxu0 0.0
  %1407 = vmatprep.subr.mxu0 0.0
  %1408 = vmatpush1.msra.mxu0 0.0
  %1409 = vmatprep.subr.mxu0 0.0
  %1410 = vmatpush1.msra.mxu0 0.0
  %1411 = vmatprep.subr.mxu0 0.0
  %1412 = vmatpush1.msra.mxu0 0.0
  %1413 = vmatprep.subr.mxu0 0.0
  %1414 = vmatpush1.msra.mxu0 0.0
  %1415 = vmatprep.subr.mxu0 0.0
  %1416 = vmatpush1.msra.mxu0 %v399
  %1417 = vmatprep.subr.mxu0 0.0
  %1418 = vmatpush1.msra.mxu0 %v398
  %1419 = vmatprep.subr.mxu0 0.0
  %1420 = vmatpush1.msra.mxu0 %v397
  %1421 = vmatprep.subr.mxu0 0.0
  %1422 = vmatpush1.msra.mxu0 %v396
  %1423 = vmatprep.subr.mxu0 0.0
  %1424 = vmatpush1.msra.mxu0 %v395
  %1425 = vmatprep.subr.mxu0 0.0
  %1426 = vmatpush1.msra.mxu0 %v394
  %1427 = vmatprep.subr.mxu0 0.0
  %1428 = vmatpush1.msra.mxu0 %v393
  %1429 = vmatprep.subr.mxu0 0.0
  %1430 = vmatpush1.msra.mxu0 %v392
  %1431 = vmatprep.subr.mxu0 0.0
  %1432 = vmatpush2.msra.mxu0 0.0
  %1433 = vmatprep.subr.mxu0 0.0
  %1434 = vmatpush2.msra.mxu0 0.0
  %1435 = vmatprep.subr.mxu0 0.0
  %1436 = vmatpush2.msra.mxu0 0.0
  %1437 = vmatprep.subr.mxu0 0.0
  %1438 = vmatpush2.msra.mxu0 0.0
  %1439 = vmatprep.subr.mxu0 0.0
  %1440 = vmatpush2.msra.mxu0 0.0
  %1441 = vmatprep.subr.mxu0 0.0
  %1442 = vmatpush2.msra.mxu0 0.0
  %1443 = vmatprep.subr.mxu0 0.0
  %1444 = vmatpush2.msra.mxu0 0.0
  %1445 = vmatprep.subr.mxu0 0.0
  %1446 = vmatpush2.msra.mxu0 0.0
  %1447 = vmatprep.subr.mxu0 0.0
  %1448 = vmatpush2.msra.mxu0 0.0
  %1449 = vmatprep.subr.mxu0 0.0
  %1450 = vmatpush2.msra.mxu0 0.0
  %1451 = vmatprep.subr.mxu0 0.0
  %1452 = vmatpush2.msra.mxu0 0.0
  %1453 = vmatprep.subr.mxu0 0.0
  %1454 = vmatpush2.msra.mxu0 0.0
  %1455 = vmatprep.subr.mxu0 0.0
  %1456 = vmatpush2.msra.mxu0 0.0
  %1457 = vmatprep.subr.mxu0 0.0
  %1458 = vmatpush2.msra.mxu0 0.0
  %1459 = vmatprep.subr.mxu0 0.0
  %1460 = vmatpush2.msra.mxu0 0.0
  %1461 = vmatprep.subr.mxu0 0.0
  %1462 = vmatpush2.msra.mxu0 0.0
  %1463 = vmatprep.mubr.f32.mxu0 0.0
  %1464 = vmatmul.mubr.f32.gmra.mxu0 %v1397
  %v1465 = vpop.f32.mrf.mxu0
  %v1466 = vadd.f32 0.0, %v1465
  %v1467 = vpop.f32.mrf.mxu0
  %1468 = vdwg.mxu0
  %1469 = vmatprep.subr.mxu0 0.0
  %1470 = vmatpush1.msra.mxu0 0.0
  %1471 = vmatprep.subr.mxu0 0.0
  %1472 = vmatpush1.msra.mxu0 0.0
  %1473 = vmatprep.subr.mxu0 0.0
  %1474 = vmatpush1.msra.mxu0 0.0
  %1475 = vmatprep.subr.mxu0 0.0
  %1476 = vmatpush1.msra.mxu0 0.0
  %1477 = vmatprep.subr.mxu0 0.0
  %1478 = vmatpush1.msra.mxu0 0.0
  %1479 = vmatprep.subr.mxu0 0.0
  %1480 = vmatpush1.msra.mxu0 0.0
  %1481 = vmatprep.subr.mxu0 0.0
  %1482 = vmatpush1.msra.mxu0 0.0
  %1483 = vmatprep.subr.mxu0 0.0
  %1484 = vmatpush1.msra.mxu0 0.0
  %1485 = vmatprep.subr.mxu0 0.0
  %1486 = vmatpush1.msra.mxu0 %v407
  %1487 = vmatprep.subr.mxu0 0.0
  %1488 = vmatpush1.msra.mxu0 %v406
  %1489 = vmatprep.subr.mxu0 0.0
  %1490 = vmatpush1.msra.mxu0 %v405
  %1491 = vmatprep.subr.mxu0 0.0
  %1492 = vmatpush1.msra.mxu0 %v404
  %1493 = vmatprep.subr.mxu0 0.0
  %1494 = vmatpush1.msra.mxu0 %v403
  %1495 = vmatprep.subr.mxu0 0.0
  %1496 = vmatpush1.msra.mxu0 %v402
  %1497 = vmatprep.subr.mxu0 0.0
  %1498 = vmatpush1.msra.mxu0 %v401
  %1499 = vmatprep.subr.mxu0 0.0
  %1500 = vmatpush1.msra.mxu0 %v400
  %1501 = vmatprep.subr.mxu0 0.0
  %1502 = vmatpush2.msra.mxu0 0.0
  %1503 = vmatprep.subr.mxu0 0.0
  %1504 = vmatpush2.msra.mxu0 0.0
  %1505 = vmatprep.subr.mxu0 0.0
  %1506 = vmatpush2.msra.mxu0 0.0
  %1507 = vmatprep.subr.mxu0 0.0
  %1508 = vmatpush2.msra.mxu0 0.0
  %1509 = vmatprep.subr.mxu0 0.0
  %1510 = vmatpush2.msra.mxu0 0.0
  %1511 = vmatprep.subr.mxu0 0.0
  %1512 = vmatpush2.msra.mxu0 0.0
  %1513 = vmatprep.subr.mxu0 0.0
  %1514 = vmatpush2.msra.mxu0 0.0
  %1515 = vmatprep.subr.mxu0 0.0
  %1516 = vmatpush2.msra.mxu0 0.0
  %1517 = vmatprep.subr.mxu0 0.0
  %1518 = vmatpush2.msra.mxu0 0.0
  %1519 = vmatprep.subr.mxu0 0.0
  %1520 = vmatpush2.msra.mxu0 0.0
  %1521 = vmatprep.subr.mxu0 0.0
  %1522 = vmatpush2.msra.mxu0 0.0
  %1523 = vmatprep.subr.mxu0 0.0
  %1524 = vmatpush2.msra.mxu0 0.0
  %1525 = vmatprep.subr.mxu0 0.0
  %1526 = vmatpush2.msra.mxu0 0.0
  %1527 = vmatprep.subr.mxu0 0.0
  %1528 = vmatpush2.msra.mxu0 0.0
  %1529 = vmatprep.subr.mxu0 0.0
  %1530 = vmatpush2.msra.mxu0 0.0
  %1531 = vmatprep.subr.mxu0 0.0
  %1532 = vmatpush2.msra.mxu0 0.0
  %1533 = vmatprep.mubr.f32.mxu0 0.0
  %1534 = vmatmul.mubr.f32.gmra.mxu0 %v1397
  %v1535 = vpop.f32.mrf.mxu0
  %v1536 = vadd.f32 0.0, %v1535
  %v1537 = vpop.f32.mrf.mxu0
  %1538 = vdwg.mxu0
  %v1539 = vadd.f32 %v161, %v1466
  %v1540 = vxor.u32 %v1539, 2147483648
  %v1541 = vmul.f32 %v1540, 1.442695
  %v1542 = vpow.pop %v1541
  %v1543 = vadd.f32 %v1542, 1.0
  %v1544 = vrcp.pop %v1543
  %v1545 = vmul.f32 1.0, %v1544
  %v1546 = vadd.f32 %v275, %v1536
  %v1547 = vxor.u32 %v1546, 2147483648
  %v1548 = vmul.f32 %v1547, 1.442695
  %v1549 = vpow.pop %v1548
  %v1550 = vadd.f32 %v1549, 1.0
  %v1551 = vrcp.pop %v1550
  %v1552 = vmul.f32 1.0, %v1551
  %1553 = vmatprep.subr.mxu0 0.0
  %1554 = vmatpush1.msra.mxu0 0.0
  %1555 = vmatprep.subr.mxu0 0.0
  %1556 = vmatpush1.msra.mxu0 0.0
  %1557 = vmatprep.subr.mxu0 0.0
  %1558 = vmatpush1.msra.mxu0 0.0
  %1559 = vmatprep.subr.mxu0 0.0
  %1560 = vmatpush1.msra.mxu0 0.0
  %1561 = vmatprep.subr.mxu0 0.0
  %1562 = vmatpush1.msra.mxu0 0.0
  %1563 = vmatprep.subr.mxu0 0.0
  %1564 = vmatpush1.msra.mxu0 0.0
  %1565 = vmatprep.subr.mxu0 0.0
  %1566 = vmatpush1.msra.mxu0 0.0
  %1567 = vmatprep.subr.mxu0 0.0
  %1568 = vmatpush1.msra.mxu0 0.0
  %1569 = vmatprep.subr.mxu0 0.0
  %1570 = vmatpush1.msra.mxu0 %v415
  %1571 = vmatprep.subr.mxu0 0.0
  %1572 = vmatpush1.msra.mxu0 %v414
  %1573 = vmatprep.subr.mxu0 0.0
  %1574 = vmatpush1.msra.mxu0 %v413
  %1575 = vmatprep.subr.mxu0 0.0
  %1576 = vmatpush1.msra.mxu0 %v412
  %1577 = vmatprep.subr.mxu0 0.0
  %1578 = vmatpush1.msra.mxu0 %v411
  %1579 = vmatprep.subr.mxu0 0.0
  %1580 = vmatpush1.msra.mxu0 %v410
  %1581 = vmatprep.subr.mxu0 0.0
  %1582 = vmatpush1.msra.mxu0 %v409
  %1583 = vmatprep.subr.mxu0 0.0
  %1584 = vmatpush1.msra.mxu0 %v408
  %1585 = vmatprep.subr.mxu0 0.0
  %1586 = vmatpush2.msra.mxu0 0.0
  %1587 = vmatprep.subr.mxu0 0.0
  %1588 = vmatpush2.msra.mxu0 0.0
  %1589 = vmatprep.subr.mxu0 0.0
  %1590 = vmatpush2.msra.mxu0 0.0
  %1591 = vmatprep.subr.mxu0 0.0
  %1592 = vmatpush2.msra.mxu0 0.0
  %1593 = vmatprep.subr.mxu0 0.0
  %1594 = vmatpush2.msra.mxu0 0.0
  %1595 = vmatprep.subr.mxu0 0.0
  %1596 = vmatpush2.msra.mxu0 0.0
  %1597 = vmatprep.subr.mxu0 0.0
  %1598 = vmatpush2.msra.mxu0 0.0
  %1599 = vmatprep.subr.mxu0 0.0
  %1600 = vmatpush2.msra.mxu0 0.0
  %1601 = vmatprep.subr.mxu0 0.0
  %1602 = vmatpush2.msra.mxu0 0.0
  %1603 = vmatprep.subr.mxu0 0.0
  %1604 = vmatpush2.msra.mxu0 0.0
  %1605 = vmatprep.subr.mxu0 0.0
  %1606 = vmatpush2.msra.mxu0 0.0
  %1607 = vmatprep.subr.mxu0 0.0
  %1608 = vmatpush2.msra.mxu0 0.0
  %1609 = vmatprep.subr.mxu0 0.0
  %1610 = vmatpush2.msra.mxu0 0.0
  %1611 = vmatprep.subr.mxu0 0.0
  %1612 = vmatpush2.msra.mxu0 0.0
  %1613 = vmatprep.subr.mxu0 0.0
  %1614 = vmatpush2.msra.mxu0 0.0
  %1615 = vmatprep.subr.mxu0 0.0
  %1616 = vmatpush2.msra.mxu0 0.0
  %1617 = vmatprep.mubr.f32.mxu0 0.0
  %1618 = vmatmul.mubr.f32.gmra.mxu0 %v1397
  %v1619 = vpop.f32.mrf.mxu0
  %v1620 = vadd.f32 %v421, %v1619
  %v1621 = vpop.f32.mrf.mxu0
  %1622 = vdwg.mxu0
  %v1623 = vmul.f32 %v1545, %v1620
  %v1624 = vadd.f32 %v389, %v1623
  %v1625 = vtanh.pop %v1624
  %v1626 = vsub.f32 1.0, %v1552
  %v1627 = vmul.f32 %v1626, %v1625
  %v1629 = vmul.f32 %v1552, %v1396
  %v1630 = vadd.f32 %v1627, %v1629
  %v1632 = vsel %vm423, %v1630, 0
  %1634 = vmatprep.subr.mxu0 0.0
  %1635 = vmatpush1.msra.mxu0 0.0
  %1636 = vmatprep.subr.mxu0 0.0
  %1637 = vmatpush1.msra.mxu0 0.0
  %1638 = vmatprep.subr.mxu0 0.0
  %1639 = vmatpush1.msra.mxu0 0.0
  %1640 = vmatprep.subr.mxu0 0.0
  %1641 = vmatpush1.msra.mxu0 0.0
  %1642 = vmatprep.subr.mxu0 0.0
  %1643 = vmatpush1.msra.mxu0 0.0
  %1644 = vmatprep.subr.mxu0 0.0
  %1645 = vmatpush1.msra.mxu0 0.0
  %1646 = vmatprep.subr.mxu0 0.0
  %1647 = vmatpush1.msra.mxu0 0.0
  %1648 = vmatprep.subr.mxu0 0.0
  %1649 = vmatpush1.msra.mxu0 0.0
  %1650 = vmatprep.subr.mxu0 0.0
  %1651 = vmatpush1.msra.mxu0 %v399
  %1652 = vmatprep.subr.mxu0 0.0
  %1653 = vmatpush1.msra.mxu0 %v398
  %1654 = vmatprep.subr.mxu0 0.0
  %1655 = vmatpush1.msra.mxu0 %v397
  %1656 = vmatprep.subr.mxu0 0.0
  %1657 = vmatpush1.msra.mxu0 %v396
  %1658 = vmatprep.subr.mxu0 0.0
  %1659 = vmatpush1.msra.mxu0 %v395
  %1660 = vmatprep.subr.mxu0 0.0
  %1661 = vmatpush1.msra.mxu0 %v394
  %1662 = vmatprep.subr.mxu0 0.0
  %1663 = vmatpush1.msra.mxu0 %v393
  %1664 = vmatprep.subr.mxu0 0.0
  %1665 = vmatpush1.msra.mxu0 %v392
  %1666 = vmatprep.subr.mxu0 0.0
  %1667 = vmatpush2.msra.mxu0 0.0
  %1668 = vmatprep.subr.mxu0 0.0
  %1669 = vmatpush2.msra.mxu0 0.0
  %1670 = vmatprep.subr.mxu0 0.0
  %1671 = vmatpush2.msra.mxu0 0.0
  %1672 = vmatprep.subr.mxu0 0.0
  %1673 = vmatpush2.msra.mxu0 0.0
  %1674 = vmatprep.subr.mxu0 0.0
  %1675 = vmatpush2.msra.mxu0 0.0
  %1676 = vmatprep.subr.mxu0 0.0
  %1677 = vmatpush2.msra.mxu0 0.0
  %1678 = vmatprep.subr.mxu0 0.0
  %1679 = vmatpush2.msra.mxu0 0.0
  %1680 = vmatprep.subr.mxu0 0.0
  %1681 = vmatpush2.msra.mxu0 0.0
  %1682 = vmatprep.subr.mxu0 0.0
  %1683 = vmatpush2.msra.mxu0 0.0
  %1684 = vmatprep.subr.mxu0 0.0
  %1685 = vmatpush2.msra.mxu0 0.0
  %1686 = vmatprep.subr.mxu0 0.0
  %1687 = vmatpush2.msra.mxu0 0.0
  %1688 = vmatprep.subr.mxu0 0.0
  %1689 = vmatpush2.msra.mxu0 0.0
  %1690 = vmatprep.subr.mxu0 0.0
  %1691 = vmatpush2.msra.mxu0 0.0
  %1692 = vmatprep.subr.mxu0 0.0
  %1693 = vmatpush2.msra.mxu0 0.0
  %1694 = vmatprep.subr.mxu0 0.0
  %1695 = vmatpush2.msra.mxu0 0.0
  %1696 = vmatprep.subr.mxu0 0.0
  %1697 = vmatpush2.msra.mxu0 0.0
  %1698 = vmatprep.mubr.f32.mxu0 0.0
  %1699 = vmatmul.mubr.f32.gmra.mxu0 %v1632
  %v1700 = vpop.f32.mrf.mxu0
  %v1701 = vadd.f32 0.0, %v1700
  %v1702 = vpop.f32.mrf.mxu0
  %1703 = vdwg.mxu0
  %1704 = vmatprep.subr.mxu0 0.0
  %1705 = vmatpush1.msra.mxu0 0.0
  %1706 = vmatprep.subr.mxu0 0.0
  %1707 = vmatpush1.msra.mxu0 0.0
  %1708 = vmatprep.subr.mxu0 0.0
  %1709 = vmatpush1.msra.mxu0 0.0
  %1710 = vmatprep.subr.mxu0 0.0
  %1711 = vmatpush1.msra.mxu0 0.0
  %1712 = vmatprep.subr.mxu0 0.0
  %1713 = vmatpush1.msra.mxu0 0.0
  %1714 = vmatprep.subr.mxu0 0.0
  %1715 = vmatpush1.msra.mxu0 0.0
  %1716 = vmatprep.subr.mxu0 0.0
  %1717 = vmatpush1.msra.mxu0 0.0
  %1718 = vmatprep.subr.mxu0 0.0
  %1719 = vmatpush1.msra.mxu0 0.0
  %1720 = vmatprep.subr.mxu0 0.0
  %1721 = vmatpush1.msra.mxu0 %v407
  %1722 = vmatprep.subr.mxu0 0.0
  %1723 = vmatpush1.msra.mxu0 %v406
  %1724 = vmatprep.subr.mxu0 0.0
  %1725 = vmatpush1.msra.mxu0 %v405
  %1726 = vmatprep.subr.mxu0 0.0
  %1727 = vmatpush1.msra.mxu0 %v404
  %1728 = vmatprep.subr.mxu0 0.0
  %1729 = vmatpush1.msra.mxu0 %v403
  %1730 = vmatprep.subr.mxu0 0.0
  %1731 = vmatpush1.msra.mxu0 %v402
  %1732 = vmatprep.subr.mxu0 0.0
  %1733 = vmatpush1.msra.mxu0 %v401
  %1734 = vmatprep.subr.mxu0 0.0
  %1735 = vmatpush1.msra.mxu0 %v400
  %1736 = vmatprep.subr.mxu0 0.0
  %1737 = vmatpush2.msra.mxu0 0.0
  %1738 = vmatprep.subr.mxu0 0.0
  %1739 = vmatpush2.msra.mxu0 0.0
  %1740 = vmatprep.subr.mxu0 0.0
  %1741 = vmatpush2.msra.mxu0 0.0
  %1742 = vmatprep.subr.mxu0 0.0
  %1743 = vmatpush2.msra.mxu0 0.0
  %1744 = vmatprep.subr.mxu0 0.0
  %1745 = vmatpush2.msra.mxu0 0.0
  %1746 = vmatprep.subr.mxu0 0.0
  %1747 = vmatpush2.msra.mxu0 0.0
  %1748 = vmatprep.subr.mxu0 0.0
  %1749 = vmatpush2.msra.mxu0 0.0
  %1750 = vmatprep.subr.mxu0 0.0
  %1751 = vmatpush2.msra.mxu0 0.0
  %1752 = vmatprep.subr.mxu0 0.0
  %1753 = vmatpush2.msra.mxu0 0.0
  %1754 = vmatprep.subr.mxu0 0.0
  %1755 = vmatpush2.msra.mxu0 0.0
  %1756 = vmatprep.subr.mxu0 0.0
  %1757 = vmatpush2.msra.mxu0 0.0
  %1758 = vmatprep.subr.mxu0 0.0
  %1759 = vmatpush2.msra.mxu0 0.0
  %1760 = vmatprep.subr.mxu0 0.0
  %1761 = vmatpush2.msra.mxu0 0.0
  %1762 = vmatprep.subr.mxu0 0.0
  %1763 = vmatpush2.msra.mxu0 0.0
  %1764 = vmatprep.subr.mxu0 0.0
  %1765 = vmatpush2.msra.mxu0 0.0
  %1766 = vmatprep.subr.mxu0 0.0
  %1767 = vmatpush2.msra.mxu0 0.0
  %1768 = vmatprep.mubr.f32.mxu0 0.0
  %1769 = vmatmul.mubr.f32.gmra.mxu0 %v1632
  %v1770 = vpop.f32.mrf.mxu0
  %v1771 = vadd.f32 0.0, %v1770
  %v1772 = vpop.f32.mrf.mxu0
  %1773 = vdwg.mxu0
  %v1775 = vrot.slane %v1701, 6
  %v1777 = vadd.f32 %v161, %v1775
  %v1778 = vxor.u32 %v1777, 2147483648
  %v1779 = vmul.f32 %v1778, 1.442695
  %v1780 = vpow.pop %v1779
  %v1781 = vadd.f32 %v1780, 1.0
  %v1782 = vrcp.pop %v1781
  %v1783 = vmul.f32 1.0, %v1782
  %v1785 = vrot.slane %v1771, 6
  %v1787 = vadd.f32 %v275, %v1785
  %v1788 = vxor.u32 %v1787, 2147483648
  %v1789 = vmul.f32 %v1788, 1.442695
  %v1790 = vpow.pop %v1789
  %v1791 = vadd.f32 %v1790, 1.0
  %v1792 = vrcp.pop %v1791
  %v1793 = vmul.f32 1.0, %v1792
  %1794 = vmatprep.subr.mxu0 0.0
  %1795 = vmatpush1.msra.mxu0 0.0
  %1796 = vmatprep.subr.mxu0 0.0
  %1797 = vmatpush1.msra.mxu0 0.0
  %1798 = vmatprep.subr.mxu0 0.0
  %1799 = vmatpush1.msra.mxu0 0.0
  %1800 = vmatprep.subr.mxu0 0.0
  %1801 = vmatpush1.msra.mxu0 0.0
  %1802 = vmatprep.subr.mxu0 0.0
  %1803 = vmatpush1.msra.mxu0 0.0
  %1804 = vmatprep.subr.mxu0 0.0
  %1805 = vmatpush1.msra.mxu0 0.0
  %1806 = vmatprep.subr.mxu0 0.0
  %1807 = vmatpush1.msra.mxu0 0.0
  %1808 = vmatprep.subr.mxu0 0.0
  %1809 = vmatpush1.msra.mxu0 0.0
  %1810 = vmatprep.subr.mxu0 0.0
  %1811 = vmatpush1.msra.mxu0 %v415
  %1812 = vmatprep.subr.mxu0 0.0
  %1813 = vmatpush1.msra.mxu0 %v414
  %1814 = vmatprep.subr.mxu0 0.0
  %1815 = vmatpush1.msra.mxu0 %v413
  %1816 = vmatprep.subr.mxu0 0.0
  %1817 = vmatpush1.msra.mxu0 %v412
  %1818 = vmatprep.subr.mxu0 0.0
  %1819 = vmatpush1.msra.mxu0 %v411
  %1820 = vmatprep.subr.mxu0 0.0
  %1821 = vmatpush1.msra.mxu0 %v410
  %1822 = vmatprep.subr.mxu0 0.0
  %1823 = vmatpush1.msra.mxu0 %v409
  %1824 = vmatprep.subr.mxu0 0.0
  %1825 = vmatpush1.msra.mxu0 %v408
  %1826 = vmatprep.subr.mxu0 0.0
  %1827 = vmatpush2.msra.mxu0 0.0
  %1828 = vmatprep.subr.mxu0 0.0
  %1829 = vmatpush2.msra.mxu0 0.0
  %1830 = vmatprep.subr.mxu0 0.0
  %1831 = vmatpush2.msra.mxu0 0.0
  %1832 = vmatprep.subr.mxu0 0.0
  %1833 = vmatpush2.msra.mxu0 0.0
  %1834 = vmatprep.subr.mxu0 0.0
  %1835 = vmatpush2.msra.mxu0 0.0
  %1836 = vmatprep.subr.mxu0 0.0
  %1837 = vmatpush2.msra.mxu0 0.0
  %1838 = vmatprep.subr.mxu0 0.0
  %1839 = vmatpush2.msra.mxu0 0.0
  %1840 = vmatprep.subr.mxu0 0.0
  %1841 = vmatpush2.msra.mxu0 0.0
  %1842 = vmatprep.subr.mxu0 0.0
  %1843 = vmatpush2.msra.mxu0 0.0
  %1844 = vmatprep.subr.mxu0 0.0
  %1845 = vmatpush2.msra.mxu0 0.0
  %1846 = vmatprep.subr.mxu0 0.0
  %1847 = vmatpush2.msra.mxu0 0.0
  %1848 = vmatprep.subr.mxu0 0.0
  %1849 = vmatpush2.msra.mxu0 0.0
  %1850 = vmatprep.subr.mxu0 0.0
  %1851 = vmatpush2.msra.mxu0 0.0
  %1852 = vmatprep.subr.mxu0 0.0
  %1853 = vmatpush2.msra.mxu0 0.0
  %1854 = vmatprep.subr.mxu0 0.0
  %1855 = vmatpush2.msra.mxu0 0.0
  %1856 = vmatprep.subr.mxu0 0.0
  %1857 = vmatpush2.msra.mxu0 0.0
  %1858 = vmatprep.mubr.f32.mxu0 0.0
  %1859 = vmatmul.mubr.f32.gmra.mxu0 %v1632
  %v1860 = vpop.f32.mrf.mxu0
  %v1861 = vadd.f32 %v421, %v1860
  %v1862 = vpop.f32.mrf.mxu0
  %1863 = vdwg.mxu0
  %v1865 = vrot.slane %v1861, 6
  %v1867 = vmul.f32 %v1783, %v1865
  %v1868 = vadd.f32 %v389, %v1867
  %v1869 = vtanh.pop %v1868
  %v1870 = vsub.f32 1.0, %v1793
  %v1871 = vmul.f32 %v1870, %v1869
  %v1872 = vrot.slane %v1630, 6
  %v1874 = vmul.f32 %v1793, %v1872
  %v1875 = vadd.f32 %v1871, %v1874
  %v1877 = vrot.slane %v1875, 2
  %v1878 = vsel %vm423, %v1877, 0
  %1880 = vmatprep.subr.mxu0 0.0
  %1881 = vmatpush1.msra.mxu0 0.0
  %1882 = vmatprep.subr.mxu0 0.0
  %1883 = vmatpush1.msra.mxu0 0.0
  %1884 = vmatprep.subr.mxu0 0.0
  %1885 = vmatpush1.msra.mxu0 0.0
  %1886 = vmatprep.subr.mxu0 0.0
  %1887 = vmatpush1.msra.mxu0 0.0
  %1888 = vmatprep.subr.mxu0 0.0
  %1889 = vmatpush1.msra.mxu0 0.0
  %1890 = vmatprep.subr.mxu0 0.0
  %1891 = vmatpush1.msra.mxu0 0.0
  %1892 = vmatprep.subr.mxu0 0.0
  %1893 = vmatpush1.msra.mxu0 0.0
  %1894 = vmatprep.subr.mxu0 0.0
  %1895 = vmatpush1.msra.mxu0 0.0
  %1896 = vmatprep.subr.mxu0 0.0
  %1897 = vmatpush1.msra.mxu0 %v399
  %1898 = vmatprep.subr.mxu0 0.0
  %1899 = vmatpush1.msra.mxu0 %v398
  %1900 = vmatprep.subr.mxu0 0.0
  %1901 = vmatpush1.msra.mxu0 %v397
  %1902 = vmatprep.subr.mxu0 0.0
  %1903 = vmatpush1.msra.mxu0 %v396
  %1904 = vmatprep.subr.mxu0 0.0
  %1905 = vmatpush1.msra.mxu0 %v395
  %1906 = vmatprep.subr.mxu0 0.0
  %1907 = vmatpush1.msra.mxu0 %v394
  %1908 = vmatprep.subr.mxu0 0.0
  %1909 = vmatpush1.msra.mxu0 %v393
  %1910 = vmatprep.subr.mxu0 0.0
  %1911 = vmatpush1.msra.mxu0 %v392
  %1912 = vmatprep.subr.mxu0 0.0
  %1913 = vmatpush2.msra.mxu0 0.0
  %1914 = vmatprep.subr.mxu0 0.0
  %1915 = vmatpush2.msra.mxu0 0.0
  %1916 = vmatprep.subr.mxu0 0.0
  %1917 = vmatpush2.msra.mxu0 0.0
  %1918 = vmatprep.subr.mxu0 0.0
  %1919 = vmatpush2.msra.mxu0 0.0
  %1920 = vmatprep.subr.mxu0 0.0
  %1921 = vmatpush2.msra.mxu0 0.0
  %1922 = vmatprep.subr.mxu0 0.0
  %1923 = vmatpush2.msra.mxu0 0.0
  %1924 = vmatprep.subr.mxu0 0.0
  %1925 = vmatpush2.msra.mxu0 0.0
  %1926 = vmatprep.subr.mxu0 0.0
  %1927 = vmatpush2.msra.mxu0 0.0
  %1928 = vmatprep.subr.mxu0 0.0
  %1929 = vmatpush2.msra.mxu0 0.0
  %1930 = vmatprep.subr.mxu0 0.0
  %1931 = vmatpush2.msra.mxu0 0.0
  %1932 = vmatprep.subr.mxu0 0.0
  %1933 = vmatpush2.msra.mxu0 0.0
  %1934 = vmatprep.subr.mxu0 0.0
  %1935 = vmatpush2.msra.mxu0 0.0
  %1936 = vmatprep.subr.mxu0 0.0
  %1937 = vmatpush2.msra.mxu0 0.0
  %1938 = vmatprep.subr.mxu0 0.0
  %1939 = vmatpush2.msra.mxu0 0.0
  %1940 = vmatprep.subr.mxu0 0.0
  %1941 = vmatpush2.msra.mxu0 0.0
  %1942 = vmatprep.subr.mxu0 0.0
  %1943 = vmatpush2.msra.mxu0 0.0
  %1944 = vmatprep.mubr.f32.mxu0 0.0
  %1945 = vmatmul.mubr.f32.gmra.mxu0 %v1878
  %v1946 = vpop.f32.mrf.mxu0
  %v1947 = vadd.f32 0.0, %v1946
  %v1948 = vpop.f32.mrf.mxu0
  %1949 = vdwg.mxu0
  %1950 = vmatprep.subr.mxu0 0.0
  %1951 = vmatpush1.msra.mxu0 0.0
  %1952 = vmatprep.subr.mxu0 0.0
  %1953 = vmatpush1.msra.mxu0 0.0
  %1954 = vmatprep.subr.mxu0 0.0
  %1955 = vmatpush1.msra.mxu0 0.0
  %1956 = vmatprep.subr.mxu0 0.0
  %1957 = vmatpush1.msra.mxu0 0.0
  %1958 = vmatprep.subr.mxu0 0.0
  %1959 = vmatpush1.msra.mxu0 0.0
  %1960 = vmatprep.subr.mxu0 0.0
  %1961 = vmatpush1.msra.mxu0 0.0
  %1962 = vmatprep.subr.mxu0 0.0
  %1963 = vmatpush1.msra.mxu0 0.0
  %1964 = vmatprep.subr.mxu0 0.0
  %1965 = vmatpush1.msra.mxu0 0.0
  %1966 = vmatprep.subr.mxu0 0.0
  %1967 = vmatpush1.msra.mxu0 %v407
  %1968 = vmatprep.subr.mxu0 0.0
  %1969 = vmatpush1.msra.mxu0 %v406
  %1970 = vmatprep.subr.mxu0 0.0
  %1971 = vmatpush1.msra.mxu0 %v405
  %1972 = vmatprep.subr.mxu0 0.0
  %1973 = vmatpush1.msra.mxu0 %v404
  %1974 = vmatprep.subr.mxu0 0.0
  %1975 = vmatpush1.msra.mxu0 %v403
  %1976 = vmatprep.subr.mxu0 0.0
  %1977 = vmatpush1.msra.mxu0 %v402
  %1978 = vmatprep.subr.mxu0 0.0
  %1979 = vmatpush1.msra.mxu0 %v401
  %1980 = vmatprep.subr.mxu0 0.0
  %1981 = vmatpush1.msra.mxu0 %v400
  %1982 = vmatprep.subr.mxu0 0.0
  %1983 = vmatpush2.msra.mxu0 0.0
  %1984 = vmatprep.subr.mxu0 0.0
  %1985 = vmatpush2.msra.mxu0 0.0
  %1986 = vmatprep.subr.mxu0 0.0
  %1987 = vmatpush2.msra.mxu0 0.0
  %1988 = vmatprep.subr.mxu0 0.0
  %1989 = vmatpush2.msra.mxu0 0.0
  %1990 = vmatprep.subr.mxu0 0.0
  %1991 = vmatpush2.msra.mxu0 0.0
  %1992 = vmatprep.subr.mxu0 0.0
  %1993 = vmatpush2.msra.mxu0 0.0
  %1994 = vmatprep.subr.mxu0 0.0
  %1995 = vmatpush2.msra.mxu0 0.0
  %1996 = vmatprep.subr.mxu0 0.0
  %1997 = vmatpush2.msra.mxu0 0.0
  %1998 = vmatprep.subr.mxu0 0.0
  %1999 = vmatpush2.msra.mxu0 0.0
  %2000 = vmatprep.subr.mxu0 0.0
  %2001 = vmatpush2.msra.mxu0 0.0
  %2002 = vmatprep.subr.mxu0 0.0
  %2003 = vmatpush2.msra.mxu0 0.0
  %2004 = vmatprep.subr.mxu0 0.0
  %2005 = vmatpush2.msra.mxu0 0.0
  %2006 = vmatprep.subr.mxu0 0.0
  %2007 = vmatpush2.msra.mxu0 0.0
  %2008 = vmatprep.subr.mxu0 0.0
  %2009 = vmatpush2.msra.mxu0 0.0
  %2010 = vmatprep.subr.mxu0 0.0
  %2011 = vmatpush2.msra.mxu0 0.0
  %2012 = vmatprep.subr.mxu0 0.0
  %2013 = vmatpush2.msra.mxu0 0.0
  %2014 = vmatprep.mubr.f32.mxu0 0.0
  %2015 = vmatmul.mubr.f32.gmra.mxu0 %v1878
  %v2016 = vpop.f32.mrf.mxu0
  %v2017 = vadd.f32 0.0, %v2016
  %v2018 = vpop.f32.mrf.mxu0
  %2019 = vdwg.mxu0
  %v2021 = vrot.slane %v1947, 4
  %v2023 = vadd.f32 %v161, %v2021
  %v2024 = vxor.u32 %v2023, 2147483648
  %v2025 = vmul.f32 %v2024, 1.442695
  %v2026 = vpow.pop %v2025
  %v2027 = vadd.f32 %v2026, 1.0
  %v2028 = vrcp.pop %v2027
  %v2029 = vmul.f32 1.0, %v2028
  %v2031 = vrot.slane %v2017, 4
  %v2033 = vadd.f32 %v275, %v2031
  %v2034 = vxor.u32 %v2033, 2147483648
  %v2035 = vmul.f32 %v2034, 1.442695
  %v2036 = vpow.pop %v2035
  %v2037 = vadd.f32 %v2036, 1.0
  %v2038 = vrcp.pop %v2037
  %v2039 = vmul.f32 1.0, %v2038
  %2040 = vmatprep.subr.mxu0 0.0
  %2041 = vmatpush1.msra.mxu0 0.0
  %2042 = vmatprep.subr.mxu0 0.0
  %2043 = vmatpush1.msra.mxu0 0.0
  %2044 = vmatprep.subr.mxu0 0.0
  %2045 = vmatpush1.msra.mxu0 0.0
  %2046 = vmatprep.subr.mxu0 0.0
  %2047 = vmatpush1.msra.mxu0 0.0
  %2048 = vmatprep.subr.mxu0 0.0
  %2049 = vmatpush1.msra.mxu0 0.0
  %2050 = vmatprep.subr.mxu0 0.0
  %2051 = vmatpush1.msra.mxu0 0.0
  %2052 = vmatprep.subr.mxu0 0.0
  %2053 = vmatpush1.msra.mxu0 0.0
  %2054 = vmatprep.subr.mxu0 0.0
  %2055 = vmatpush1.msra.mxu0 0.0
  %2056 = vmatprep.subr.mxu0 0.0
  %2057 = vmatpush1.msra.mxu0 %v415
  %2058 = vmatprep.subr.mxu0 0.0
  %2059 = vmatpush1.msra.mxu0 %v414
  %2060 = vmatprep.subr.mxu0 0.0
  %2061 = vmatpush1.msra.mxu0 %v413
  %2062 = vmatprep.subr.mxu0 0.0
  %2063 = vmatpush1.msra.mxu0 %v412
  %2064 = vmatprep.subr.mxu0 0.0
  %2065 = vmatpush1.msra.mxu0 %v411
  %2066 = vmatprep.subr.mxu0 0.0
  %2067 = vmatpush1.msra.mxu0 %v410
  %2068 = vmatprep.subr.mxu0 0.0
  %2069 = vmatpush1.msra.mxu0 %v409
  %2070 = vmatprep.subr.mxu0 0.0
  %2071 = vmatpush1.msra.mxu0 %v408
  %2072 = vmatprep.subr.mxu0 0.0
  %2073 = vmatpush2.msra.mxu0 0.0
  %2074 = vmatprep.subr.mxu0 0.0
  %2075 = vmatpush2.msra.mxu0 0.0
  %2076 = vmatprep.subr.mxu0 0.0
  %2077 = vmatpush2.msra.mxu0 0.0
  %2078 = vmatprep.subr.mxu0 0.0
  %2079 = vmatpush2.msra.mxu0 0.0
  %2080 = vmatprep.subr.mxu0 0.0
  %2081 = vmatpush2.msra.mxu0 0.0
  %2082 = vmatprep.subr.mxu0 0.0
  %2083 = vmatpush2.msra.mxu0 0.0
  %2084 = vmatprep.subr.mxu0 0.0
  %2085 = vmatpush2.msra.mxu0 0.0
  %2086 = vmatprep.subr.mxu0 0.0
  %2087 = vmatpush2.msra.mxu0 0.0
  %2088 = vmatprep.subr.mxu0 0.0
  %2089 = vmatpush2.msra.mxu0 0.0
  %2090 = vmatprep.subr.mxu0 0.0
  %2091 = vmatpush2.msra.mxu0 0.0
  %2092 = vmatprep.subr.mxu0 0.0
  %2093 = vmatpush2.msra.mxu0 0.0
  %2094 = vmatprep.subr.mxu0 0.0
  %2095 = vmatpush2.msra.mxu0 0.0
  %2096 = vmatprep.subr.mxu0 0.0
  %2097 = vmatpush2.msra.mxu0 0.0
  %2098 = vmatprep.subr.mxu0 0.0
  %2099 = vmatpush2.msra.mxu0 0.0
  %2100 = vmatprep.subr.mxu0 0.0
  %2101 = vmatpush2.msra.mxu0 0.0
  %2102 = vmatprep.subr.mxu0 0.0
  %2103 = vmatpush2.msra.mxu0 0.0
  %2104 = vmatprep.mubr.f32.mxu0 0.0
  %2105 = vmatmul.mubr.f32.gmra.mxu0 %v1878
  %v2106 = vpop.f32.mrf.mxu0
  %v2107 = vadd.f32 %v421, %v2106
  %v2108 = vpop.f32.mrf.mxu0
  %2109 = vdwg.mxu0
  %v2111 = vrot.slane %v2107, 4
  %v2113 = vmul.f32 %v2029, %v2111
  %v2114 = vadd.f32 %v389, %v2113
  %v2115 = vtanh.pop %v2114
  %v2116 = vsub.f32 1.0, %v2039
  %v2117 = vmul.f32 %v2116, %v2115
  %v2118 = vrot.slane %v1875, 6
  %v2120 = vmul.f32 %v2039, %v2118
  %v2121 = vadd.f32 %v2117, %v2120
  %v2123 = vrot.slane %v2121, 4
  %v2124 = vsel %vm423, %v2123, 0
  %2126 = vmatprep.subr.mxu0 0.0
  %2127 = vmatpush1.msra.mxu0 0.0
  %2128 = vmatprep.subr.mxu0 0.0
  %2129 = vmatpush1.msra.mxu0 0.0
  %2130 = vmatprep.subr.mxu0 0.0
  %2131 = vmatpush1.msra.mxu0 0.0
  %2132 = vmatprep.subr.mxu0 0.0
  %2133 = vmatpush1.msra.mxu0 0.0
  %2134 = vmatprep.subr.mxu0 0.0
  %2135 = vmatpush1.msra.mxu0 0.0
  %2136 = vmatprep.subr.mxu0 0.0
  %2137 = vmatpush1.msra.mxu0 0.0
  %2138 = vmatprep.subr.mxu0 0.0
  %2139 = vmatpush1.msra.mxu0 0.0
  %2140 = vmatprep.subr.mxu0 0.0
  %2141 = vmatpush1.msra.mxu0 0.0
  %2142 = vmatprep.subr.mxu0 0.0
  %2143 = vmatpush1.msra.mxu0 %v399
  %2144 = vmatprep.subr.mxu0 0.0
  %2145 = vmatpush1.msra.mxu0 %v398
  %2146 = vmatprep.subr.mxu0 0.0
  %2147 = vmatpush1.msra.mxu0 %v397
  %2148 = vmatprep.subr.mxu0 0.0
  %2149 = vmatpush1.msra.mxu0 %v396
  %2150 = vmatprep.subr.mxu0 0.0
  %2151 = vmatpush1.msra.mxu0 %v395
  %2152 = vmatprep.subr.mxu0 0.0
  %2153 = vmatpush1.msra.mxu0 %v394
  %2154 = vmatprep.subr.mxu0 0.0
  %2155 = vmatpush1.msra.mxu0 %v393
  %2156 = vmatprep.subr.mxu0 0.0
  %2157 = vmatpush1.msra.mxu0 %v392
  %2158 = vmatprep.subr.mxu0 0.0
  %2159 = vmatpush2.msra.mxu0 0.0
  %2160 = vmatprep.subr.mxu0 0.0
  %2161 = vmatpush2.msra.mxu0 0.0
  %2162 = vmatprep.subr.mxu0 0.0
  %2163 = vmatpush2.msra.mxu0 0.0
  %2164 = vmatprep.subr.mxu0 0.0
  %2165 = vmatpush2.msra.mxu0 0.0
  %2166 = vmatprep.subr.mxu0 0.0
  %2167 = vmatpush2.msra.mxu0 0.0
  %2168 = vmatprep.subr.mxu0 0.0
  %2169 = vmatpush2.msra.mxu0 0.0
  %2170 = vmatprep.subr.mxu0 0.0
  %2171 = vmatpush2.msra.mxu0 0.0
  %2172 = vmatprep.subr.mxu0 0.0
  %2173 = vmatpush2.msra.mxu0 0.0
  %2174 = vmatprep.subr.mxu0 0.0
  %2175 = vmatpush2.msra.mxu0 0.0
  %2176 = vmatprep.subr.mxu0 0.0
  %2177 = vmatpush2.msra.mxu0 0.0
  %2178 = vmatprep.subr.mxu0 0.0
  %2179 = vmatpush2.msra.mxu0 0.0
  %2180 = vmatprep.subr.mxu0 0.0
  %2181 = vmatpush2.msra.mxu0 0.0
  %2182 = vmatprep.subr.mxu0 0.0
  %2183 = vmatpush2.msra.mxu0 0.0
  %2184 = vmatprep.subr.mxu0 0.0
  %2185 = vmatpush2.msra.mxu0 0.0
  %2186 = vmatprep.subr.mxu0 0.0
  %2187 = vmatpush2.msra.mxu0 0.0
  %2188 = vmatprep.subr.mxu0 0.0
  %2189 = vmatpush2.msra.mxu0 0.0
  %2190 = vmatprep.mubr.f32.mxu0 0.0
  %2191 = vmatmul.mubr.f32.gmra.mxu0 %v2124
  %v2192 = vpop.f32.mrf.mxu0
  %v2193 = vadd.f32 0.0, %v2192
  %v2194 = vpop.f32.mrf.mxu0
  %2195 = vdwg.mxu0
  %2196 = vmatprep.subr.mxu0 0.0
  %2197 = vmatpush1.msra.mxu0 0.0
  %2198 = vmatprep.subr.mxu0 0.0
  %2199 = vmatpush1.msra.mxu0 0.0
  %2200 = vmatprep.subr.mxu0 0.0
  %2201 = vmatpush1.msra.mxu0 0.0
  %2202 = vmatprep.subr.mxu0 0.0
  %2203 = vmatpush1.msra.mxu0 0.0
  %2204 = vmatprep.subr.mxu0 0.0
  %2205 = vmatpush1.msra.mxu0 0.0
  %2206 = vmatprep.subr.mxu0 0.0
  %2207 = vmatpush1.msra.mxu0 0.0
  %2208 = vmatprep.subr.mxu0 0.0
  %2209 = vmatpush1.msra.mxu0 0.0
  %2210 = vmatprep.subr.mxu0 0.0
  %2211 = vmatpush1.msra.mxu0 0.0
  %2212 = vmatprep.subr.mxu0 0.0
  %2213 = vmatpush1.msra.mxu0 %v407
  %2214 = vmatprep.subr.mxu0 0.0
  %2215 = vmatpush1.msra.mxu0 %v406
  %2216 = vmatprep.subr.mxu0 0.0
  %2217 = vmatpush1.msra.mxu0 %v405
  %2218 = vmatprep.subr.mxu0 0.0
  %2219 = vmatpush1.msra.mxu0 %v404
  %2220 = vmatprep.subr.mxu0 0.0
  %2221 = vmatpush1.msra.mxu0 %v403
  %2222 = vmatprep.subr.mxu0 0.0
  %2223 = vmatpush1.msra.mxu0 %v402
  %2224 = vmatprep.subr.mxu0 0.0
  %2225 = vmatpush1.msra.mxu0 %v401
  %2226 = vmatprep.subr.mxu0 0.0
  %2227 = vmatpush1.msra.mxu0 %v400
  %2228 = vmatprep.subr.mxu0 0.0
  %2229 = vmatpush2.msra.mxu0 0.0
  %2230 = vmatprep.subr.mxu0 0.0
  %2231 = vmatpush2.msra.mxu0 0.0
  %2232 = vmatprep.subr.mxu0 0.0
  %2233 = vmatpush2.msra.mxu0 0.0
  %2234 = vmatprep.subr.mxu0 0.0
  %2235 = vmatpush2.msra.mxu0 0.0
  %2236 = vmatprep.subr.mxu0 0.0
  %2237 = vmatpush2.msra.mxu0 0.0
  %2238 = vmatprep.subr.mxu0 0.0
  %2239 = vmatpush2.msra.mxu0 0.0
  %2240 = vmatprep.subr.mxu0 0.0
  %2241 = vmatpush2.msra.mxu0 0.0
  %2242 = vmatprep.subr.mxu0 0.0
  %2243 = vmatpush2.msra.mxu0 0.0
  %2244 = vmatprep.subr.mxu0 0.0
  %2245 = vmatpush2.msra.mxu0 0.0
  %2246 = vmatprep.subr.mxu0 0.0
  %2247 = vmatpush2.msra.mxu0 0.0
  %2248 = vmatprep.subr.mxu0 0.0
  %2249 = vmatpush2.msra.mxu0 0.0
  %2250 = vmatprep.subr.mxu0 0.0
  %2251 = vmatpush2.msra.mxu0 0.0
  %2252 = vmatprep.subr.mxu0 0.0
  %2253 = vmatpush2.msra.mxu0 0.0
  %2254 = vmatprep.subr.mxu0 0.0
  %2255 = vmatpush2.msra.mxu0 0.0
  %2256 = vmatprep.subr.mxu0 0.0
  %2257 = vmatpush2.msra.mxu0 0.0
  %2258 = vmatprep.subr.mxu0 0.0
  %2259 = vmatpush2.msra.mxu0 0.0
  %2260 = vmatprep.mubr.f32.mxu0 0.0
  %2261 = vmatmul.mubr.f32.gmra.mxu0 %v2124
  %v2262 = vpop.f32.mrf.mxu0
  %v2263 = vadd.f32 0.0, %v2262
  %v2264 = vpop.f32.mrf.mxu0
  %2265 = vdwg.mxu0
  %v2267 = vrot.slane %v2193, 2
  %v2269 = vadd.f32 %v161, %v2267
  %v2270 = vxor.u32 %v2269, 2147483648
  %v2271 = vmul.f32 %v2270, 1.442695
  %v2272 = vpow.pop %v2271
  %v2273 = vadd.f32 %v2272, 1.0
  %v2274 = vrcp.pop %v2273
  %v2275 = vmul.f32 1.0, %v2274
  %v2277 = vrot.slane %v2263, 2
  %v2279 = vadd.f32 %v275, %v2277
  %v2280 = vxor.u32 %v2279, 2147483648
  %v2281 = vmul.f32 %v2280, 1.442695
  %v2282 = vpow.pop %v2281
  %v2283 = vadd.f32 %v2282, 1.0
  %v2284 = vrcp.pop %v2283
  %v2285 = vmul.f32 1.0, %v2284
  %2286 = vmatprep.subr.mxu0 0.0
  %2287 = vmatpush1.msra.mxu0 0.0
  %2288 = vmatprep.subr.mxu0 0.0
  %2289 = vmatpush1.msra.mxu0 0.0
  %2290 = vmatprep.subr.mxu0 0.0
  %2291 = vmatpush1.msra.mxu0 0.0
  %2292 = vmatprep.subr.mxu0 0.0
  %2293 = vmatpush1.msra.mxu0 0.0
  %2294 = vmatprep.subr.mxu0 0.0
  %2295 = vmatpush1.msra.mxu0 0.0
  %2296 = vmatprep.subr.mxu0 0.0
  %2297 = vmatpush1.msra.mxu0 0.0
  %2298 = vmatprep.subr.mxu0 0.0
  %2299 = vmatpush1.msra.mxu0 0.0
  %2300 = vmatprep.subr.mxu0 0.0
  %2301 = vmatpush1.msra.mxu0 0.0
  %2302 = vmatprep.subr.mxu0 0.0
  %2303 = vmatpush1.msra.mxu0 %v415
  %2304 = vmatprep.subr.mxu0 0.0
  %2305 = vmatpush1.msra.mxu0 %v414
  %2306 = vmatprep.subr.mxu0 0.0
  %2307 = vmatpush1.msra.mxu0 %v413
  %2308 = vmatprep.subr.mxu0 0.0
  %2309 = vmatpush1.msra.mxu0 %v412
  %2310 = vmatprep.subr.mxu0 0.0
  %2311 = vmatpush1.msra.mxu0 %v411
  %2312 = vmatprep.subr.mxu0 0.0
  %2313 = vmatpush1.msra.mxu0 %v410
  %2314 = vmatprep.subr.mxu0 0.0
  %2315 = vmatpush1.msra.mxu0 %v409
  %2316 = vmatprep.subr.mxu0 0.0
  %2317 = vmatpush1.msra.mxu0 %v408
  %2318 = vmatprep.subr.mxu0 0.0
  %2319 = vmatpush2.msra.mxu0 0.0
  %2320 = vmatprep.subr.mxu0 0.0
  %2321 = vmatpush2.msra.mxu0 0.0
  %2322 = vmatprep.subr.mxu0 0.0
  %2323 = vmatpush2.msra.mxu0 0.0
  %2324 = vmatprep.subr.mxu0 0.0
  %2325 = vmatpush2.msra.mxu0 0.0
  %2326 = vmatprep.subr.mxu0 0.0
  %2327 = vmatpush2.msra.mxu0 0.0
  %2328 = vmatprep.subr.mxu0 0.0
  %2329 = vmatpush2.msra.mxu0 0.0
  %2330 = vmatprep.subr.mxu0 0.0
  %2331 = vmatpush2.msra.mxu0 0.0
  %2332 = vmatprep.subr.mxu0 0.0
  %2333 = vmatpush2.msra.mxu0 0.0
  %2334 = vmatprep.subr.mxu0 0.0
  %2335 = vmatpush2.msra.mxu0 0.0
  %2336 = vmatprep.subr.mxu0 0.0
  %2337 = vmatpush2.msra.mxu0 0.0
  %2338 = vmatprep.subr.mxu0 0.0
  %2339 = vmatpush2.msra.mxu0 0.0
  %2340 = vmatprep.subr.mxu0 0.0
  %2341 = vmatpush2.msra.mxu0 0.0
  %2342 = vmatprep.subr.mxu0 0.0
  %2343 = vmatpush2.msra.mxu0 0.0
  %2344 = vmatprep.subr.mxu0 0.0
  %2345 = vmatpush2.msra.mxu0 0.0
  %2346 = vmatprep.subr.mxu0 0.0
  %2347 = vmatpush2.msra.mxu0 0.0
  %2348 = vmatprep.subr.mxu0 0.0
  %2349 = vmatpush2.msra.mxu0 0.0
  %2350 = vmatprep.mubr.f32.mxu0 0.0
  %2351 = vmatmul.mubr.f32.gmra.mxu0 %v2124
  %v2352 = vpop.f32.mrf.mxu0
  %v2353 = vadd.f32 %v421, %v2352
  %v2354 = vpop.f32.mrf.mxu0
  %2355 = vdwg.mxu0
  %v2357 = vrot.slane %v2353, 2
  %v2359 = vmul.f32 %v2275, %v2357
  %v2360 = vadd.f32 %v389, %v2359
  %v2361 = vtanh.pop %v2360
  %v2362 = vsub.f32 1.0, %v2285
  %v2363 = vmul.f32 %v2362, %v2361
  %v2364 = vrot.slane %v2121, 6
  %v2366 = vmul.f32 %v2285, %v2364
  %v2367 = vadd.f32 %v2363, %v2366
  %v2368 = vld [vmem:[%s11] sm:$0x1]
  %v2370 = vlaneseq
  %v2371 = vshrl.u32 %v2370, 7
  %v2372 = vsub.s32 0, %v2371
  %v2373 = vrot.slane %v2368, %v2372
  %v2375 = vmul.f32 %v2367, %v2373
  %vm2376 = vcmask 523270
  %v2377 = vsel %vm2376, %v2375, 0.0
  %2378 = vadd.xlane.f32.xlu0 %v2377
  %v2379 = vpop.xlane.xlu0 %2378
  %v2380 = vld [vmem:[#allocation2] sm:$0x1]
  %v2382 = vlaneseq
  %v2383 = vshrl.u32 %v2382, 7
  %v2384 = vsub.s32 0, %v2383
  %v2385 = vrot.slane %v2380, %v2384
  %v2387 = vadd.f32 %v2379, %v2385
  %vm2388 = vcmask 7174
  %2389 = vst.msk [vmem:[%s13 - $0x6] sm:$0xc0] %vm2388, %v2387
  // Predicated region
  $region54: #{tpu_custom_call.1} parent=0 // pred_check
    _
  $region55: #{tpu_custom_call.1} parent=0 // pred_check_branch
    %2391 = sbr.rel (0) target = $region57
  $region56: #{tpu_custom_call.1} parent=0 // pred_region
    _
  $region57: #{tpu_custom_call.1} parent=0 // pred_fallthru
    _
  // Predicated region
  $region58: #{tpu_custom_call.1} parent=0 // pred_check
    _
  $region59: #{tpu_custom_call.1} parent=0 // pred_check_branch
    %2393 = sbr.rel (0) target = $region61
  $region60: #{tpu_custom_call.1} parent=0 // pred_region
    _
  $region61: #{tpu_custom_call.1} parent=0 // pred_fallthru
    _

</llo_original>
